<compile_context>
chip_gen: v7x
topology: tpu7x:2x2x1
jax: 0.10.0
libtpu: 0.0.40
codegen_flags: <defaults>
</compile_context>

<pallas_src>
import jax
import jax.numpy as jnp
from jax.experimental import pallas as pl
from jax.experimental.pallas import tpu as pltpu


def prelinear_kernel(x_ref, w_ref, b_ref, o_ref):
    # x_ref: (TM, K) f32   w_ref: (K, N) bf16 (VMEM-resident)
    # b_ref: (1, N)  f32   o_ref: (TM, N) f32
    x = x_ref[...].astype(w_ref.dtype)               # bf16 operands feed the MXU
    acc = jnp.dot(x, w_ref[...], preferred_element_type=jnp.float32)
    o_ref[...] = (acc + b_ref[...]).astype(o_ref.dtype)


def fuse_qkv_params(w, b, *, compute_dtype=jnp.bfloat16):
    """One-time layout plumbing: fuse (3, NH, H) into a lane-dense N axis.

    w: (3, NH, K, H) -> (K, 3*NH*H) in `compute_dtype`
    b: (3, NH, 1, H) -> (1, 3*NH*H) in f32 (added post-accumulation)
    Cache the result at parameter-initialization time; do NOT recompute per call.
    """
    three, nh, K, H = w.shape
    N = three * nh * H
    w_fused = jnp.transpose(w, (2, 0, 1, 3)).reshape(K, N).astype(compute_dtype)
    b_fused = jnp.transpose(b, (2, 0, 1, 3)).reshape(1, N).astype(jnp.float32)
    return w_fused, b_fused


def _pick_tm(M, target):
    """M tile: full extent when small, otherwise a sublane-aligned target.
    The grid uses pl.cdiv, so tm does not need to divide M."""
    if M <= target:
        return M
    return max(8, (target // 8) * 8)


def _vmem_cap_bytes():
    """Per-core VMEM cap for vmem_limit_bytes (75% of capacity, with a
    conservative fallback that is safe on v7x's 64 MiB per TensorCore)."""
    try:
        return int(0.75 * pltpu.get_tpu_info().vmem_capacity_bytes)
    except Exception:
        return 48 * 1024 * 1024


def pre_linear_fused(inp, w_fused, b_fused, *, tm_target=512):
    """qkv = inp @ W + b in the fused layout.

    inp: (M, K) f32;  w_fused: (K, 3*NH*H) bf16;  b_fused: (1, 3*NH*H) f32
    returns: (M, 3*NH*H) f32
    """
    M, K = inp.shape
    Kw, N = w_fused.shape
    assert Kw == K

    tm = _pick_tm(M, tm_target)
    grid_m = pl.cdiv(M, tm)

    xb = jnp.dtype(inp.dtype).itemsize
    wb = jnp.dtype(w_fused.dtype).itemsize
    # Working set (Pallas double-buffers each operand by default; the constant
    # index_map means the weight/bias second buffer is never refilled, but we
    # still budget for it).
    need = (2 * tm * K * xb        # activation tiles (pipelined along M)
            + 2 * K * N * wb       # resident fused weight
            + 2 * N * 4            # resident bias row
            + 2 * tm * N * 4)      # output tiles (pipelined along M)
    vmem_limit = min(max((need * 5) // 4, 32 * 1024 * 1024), _vmem_cap_bytes())

    cost = pl.CostEstimate(
        flops=2 * M * K * N,
        transcendentals=0,
        bytes_accessed=M * K * xb + K * N * wb + N * 4 + M * N * 4,
    )

    return pl.pallas_call(
        prelinear_kernel,
        out_shape=jax.ShapeDtypeStruct((M, N), jnp.float32),
        grid_spec=pltpu.PrefetchScalarGridSpec(
            num_scalar_prefetch=0,
            grid=(grid_m,),
            in_specs=[
                # Activation tile streams along M.
                pl.BlockSpec((tm, K), lambda m: (m, 0)),
                # Full fused weight: constant index -> DMA'd once, VMEM-resident.
                pl.BlockSpec((K, N), lambda m: (0, 0)),
                # Full bias row: constant index -> VMEM-resident.
                pl.BlockSpec((1, N), lambda m: (0, 0)),
            ],
            out_specs=pl.BlockSpec((tm, N), lambda m: (m, 0)),
        ),
        compiler_params=pltpu.CompilerParams(
            dimension_semantics=("parallel",),   # M tiles shard across TCs (v7x)
            vmem_limit_bytes=int(vmem_limit),
        ),
        cost_estimate=cost,
    )(inp, w_fused, b_fused)


def pre_linear_forward(inp, w, b, batch_size, max_len):
    """Full PreLinear.forward: returns (q, k, v), each
    (1, num_heads, batch_size, max_len, head_size)."""
    three, nh, K, H = w.shape
    # In a real model fuse_qkv_params is called once at init time and cached.
    w_fused, b_fused = fuse_qkv_params(w, b)
    out = pre_linear_fused(inp, w_fused, b_fused)          # (M, 3*NH*H)
    # TODO(synk): downstream attention should consume the fused (M, 3, NH, H)
    # layout directly (free reshape); the transpose below exists only to
    # reproduce the PyTorch (3, NH, B, L, H) output layout exactly.
    qkv = out.reshape(-1, 3, nh, H).transpose(1, 2, 0, 3)  # (3, NH, M, H)
    qkv = qkv.reshape(3, nh, batch_size, max_len, H)       # .view()
    q, k, v = jnp.split(qkv, 3, axis=0)                    # torch.split(qkv, 1, 0)
    return q, k, v


if __name__ == "__main__":
    # Small shapes consistent with the module.
    batch_size = 2
    max_len = 8
    num_heads = 8
    head_size = 64
    model_size = num_heads * head_size  # 512

    key = jax.random.PRNGKey(0)
    k_inp, k_w, k_b = jax.random.split(key, 3)

    inp = jax.random.normal(k_inp, (batch_size * max_len, model_size), jnp.float32)
    w = jax.random.normal(k_w, (3, num_heads, model_size, head_size), jnp.float32)
    b = jax.random.normal(k_b, (3, num_heads, 1, head_size), jnp.float32)

    q, k, v = pre_linear_forward(inp, w, b, batch_size, max_len)
    jax.block_until_ready((q, k, v))
    assert q.shape == (1, num_heads, batch_size, max_len, head_size)
    assert k.shape == q.shape and v.shape == q.shape

    # Reference 1: same bf16 operand rounding as the kernel, f32 accumulation.
    inp_bf = inp.astype(jnp.bfloat16).astype(jnp.float32)
    w_bf = w.astype(jnp.bfloat16).astype(jnp.float32)
    ref = jnp.matmul(inp_bf, w_bf) + b                               # (3, NH, M, H)
    ref = ref.reshape(3, num_heads, batch_size, max_len, head_size)
    rq, rk, rv = jnp.split(ref, 3, axis=0)
    assert jnp.allclose(q, rq, atol=1e-3, rtol=1e-3)
    assert jnp.allclose(k, rk, atol=1e-3, rtol=1e-3)
    assert jnp.allclose(v, rv, atol=1e-3, rtol=1e-3)

    # Reference 2: pure-f32 PyTorch semantics (loose tolerance: bf16 MXU inputs).
    ref32 = jnp.matmul(inp, w) + b
    ref32 = ref32.reshape(3, num_heads, batch_size, max_len, head_size)
    r32q, r32k, r32v = jnp.split(ref32, 3, axis=0)
    assert jnp.allclose(q, r32q, atol=1.0, rtol=1e-1)
    assert jnp.allclose(k, r32k, atol=1.0, rtol=1e-1)
    assert jnp.allclose(v, r32v, atol=1.0, rtol=1e-1)

    print("KERNEL_OK")
</pallas_src>

<mosaic_0001>
module attributes {stable_mosaic.version = 11 : i64} {
  func.func @prelinear_kernel(%arg0: i32, %arg1: memref<16x512xf32, #tpu.memory_space<vmem>>, %arg2: memref<512x1536xbf16, #tpu.memory_space<vmem>>, %arg3: memref<1x1536xf32, #tpu.memory_space<vmem>>, %arg4: memref<16x1536xf32, #tpu.memory_space<vmem>>) attributes {dimension_semantics = [#tpu.dimension_semantics<parallel>], iteration_bounds = array<i64: 1>, scalar_prefetch = 0 : i64, scratch_operands = 0 : i64, tpu.core_type = #tpu.core_type<tc>, window_params = [{transform_indices = @transform_0, window_bounds = array<i64: 16, 512>}, {pipeline_mode = #tpu.pipeline_mode<synchronous>, transform_indices = @transform_1, window_bounds = array<i64: 512, 1536>}, {pipeline_mode = #tpu.pipeline_mode<synchronous>, transform_indices = @transform_2, window_bounds = array<i64: 1, 1536>}, {transform_indices = @transform_3, window_bounds = array<i64: 16, 1536>}]} {
    %c0 = arith.constant 0 : index
    %c0_0 = arith.constant 0 : index
    %0 = vector.load %arg1[%c0, %c0_0] : memref<16x512xf32, #tpu.memory_space<vmem>>, vector<16x512xf32>
    %1 = arith.truncf %0 : vector<16x512xf32> to vector<16x512xbf16>
    %c0_1 = arith.constant 0 : index
    %c0_2 = arith.constant 0 : index
    %2 = vector.load %arg2[%c0_1, %c0_2] : memref<512x1536xbf16, #tpu.memory_space<vmem>>, vector<512x1536xbf16>
    %cst = arith.constant dense<0.000000e+00> : vector<16x1536xf32>
    %3 = tpu.matmul %1, %2, %cst {dimension_numbers = #tpu.dot_dimension_numbers<[1], [0], [0], [1], [0, 0, 1, 1], [], []>} : vector<16x512xbf16>, vector<512x1536xbf16>, vector<16x1536xf32> -> vector<16x1536xf32>
    %c0_3 = arith.constant 0 : index
    %c0_4 = arith.constant 0 : index
    %4 = vector.load %arg3[%c0_3, %c0_4] : memref<1x1536xf32, #tpu.memory_space<vmem>>, vector<1x1536xf32>
    %5 = vector.broadcast %4 : vector<1x1536xf32> to vector<16x1536xf32>
    %6 = arith.addf %3, %5 : vector<16x1536xf32>
    %c0_5 = arith.constant 0 : index
    %c0_6 = arith.constant 0 : index
    %7 = vector.load %arg4[%c0_5, %c0_6] : memref<16x1536xf32, #tpu.memory_space<vmem>>, vector<16x1536xf32>
    tpu.vector_store %arg4[%c0_5, %c0_6], %6 {strides = array<i32>} : memref<16x1536xf32, #tpu.memory_space<vmem>>, vector<16x1536xf32>,
    return
  }
  func.func @transform_0(%arg0: i32) -> (i32, i32) {
    %c0_i32 = arith.constant 0 : i32
    %c0_i32_0 = arith.constant 0 : i32
    return %arg0, %c0_i32 : i32, i32
  }
  func.func @transform_1(%arg0: i32) -> (i32, i32) {
    %c0_i32 = arith.constant 0 : i32
    %c0_i32_0 = arith.constant 0 : i32
    %c0_i32_1 = arith.constant 0 : i32
    return %c0_i32, %c0_i32_0 : i32, i32
  }
  func.func @transform_2(%arg0: i32) -> (i32, i32) {
    %c0_i32 = arith.constant 0 : i32
    %c0_i32_0 = arith.constant 0 : i32
    %c0_i32_1 = arith.constant 0 : i32
    return %c0_i32, %c0_i32_0 : i32, i32
  }
  func.func @transform_3(%arg0: i32) -> (i32, i32) {
    %c0_i32 = arith.constant 0 : i32
    %c0_i32_0 = arith.constant 0 : i32
    return %arg0, %c0_i32 : i32, i32
  }
}

</mosaic_0001>

<llo_original>
// kernel: tpu_custom_call.1
$region0: #{tpu_custom_call.1}
  #allocation0 [shape = 'u32[]', space=smem, size = 0x4, offset = 0x4, fixed_abs, tag = 'smem constant byte address 0x4 - core index']
  #allocation1 [shape = 'u32[144,128]{1,0:T(1,128)}', space=vmem, size = 0x12000, scoped, tag = 'internal scratch']
  %s0 = inlined_call_operand.hbm [shape: f32[16,512], index: 0, kind: input, shape index: {}]
  %s1 = inlined_call_operand.hbm [shape: bf16[512,1536], index: 1, kind: input, shape index: {}]
  %s2 = inlined_call_operand.hbm [shape: f32[1,1536], index: 2, kind: input, shape index: {}]
  %s3 = inlined_call_operand.hbm [shape: f32[16,1536], index: 3, kind: output, shape index: {}]
  %s4 = sld [smem:[#allocation0]]
  $region34: #{tpu_custom_call.1} parent=0
    _
  %s6 = ssub.s32 1, %s4
  %s7 = scalar_select 0, %s6, %s4
  $region1: #{tpu_custom_call.1} parent=0
    #allocation2 [shape = 'u8[32768]{0}', space=vmem, size = 0x8000, scoped, tag = 'input window, operand 0, single buffered']
    #allocation3 [shape = 's32[1]{0}', space=sflag, size = 0x4, scoped, tag = 'scoped memory for tpu_custom_call.1']
    #allocation4 [shape = 's32[1]{0}', space=sflag, size = 0x4, scoped, tag = 'scoped memory for tpu_custom_call.1']
    #allocation5 [shape = 'u8[1572864]{0}', space=vmem, size = 0x180000, scoped, tag = 'input window, operand 1, single buffered']
    #allocation6 [shape = 's32[1]{0}', space=sflag, size = 0x4, scoped, tag = 'scoped memory for tpu_custom_call.1']
    #allocation7 [shape = 'u8[6144]{0}', space=vmem, size = 0x1800, scoped, tag = 'input window, operand 2, single buffered']
    #allocation8 [shape = 'u8[98304]{0}', space=vmem, size = 0x18000, scoped, tag = 'output window, operand 0, single buffered']
    %8 = vsyncpa [#allocation3], 0
    %9 = vsyncpa [#allocation6], 0
    %10 = vsyncpa [#allocation4], 0
    // Predicated region
    $region2: #{tpu_custom_call.1} parent=1 // pred_check
      _
    $region3: #{tpu_custom_call.1} parent=1 // pred_check_branch
      %12 = sbr.rel (0) target = $region5
    $region4: #{tpu_custom_call.1} parent=1 // pred_region
      %s14 = ssub.s32 1024, 1024
      %15 = vsyncadd [#allocation3], %s14
      %s16 = sshll.u32 [#allocation2], 4
      %s17 = int_to_ptr.vmem [resolvable:$true] %s16
      %22 = dma.hbm_to_vmem [thread:$0]  %s0, 1024, %s17, [#allocation3], 512, 512, 32
    $region5: #{tpu_custom_call.1} parent=1 // pred_fallthru
      _
    // Predicated region
    $region6: #{tpu_custom_call.1} parent=1 // pred_check
      _
    $region7: #{tpu_custom_call.1} parent=1 // pred_check_branch
      %24 = sbr.rel (0) target = $region9
    $region8: #{tpu_custom_call.1} parent=1 // pred_region
      %s26 = ssub.s32 49152, 49152
      %27 = vsyncadd [#allocation6], %s26
      %s28 = sshll.u32 [#allocation5], 4
      %s29 = int_to_ptr.vmem [resolvable:$true] %s28
      %34 = dma.hbm_to_vmem [thread:$0]  %s1, 49152, %s29, [#allocation6], 768, 768, 48
    $region9: #{tpu_custom_call.1} parent=1 // pred_fallthru
      _
    // Predicated region
    $region10: #{tpu_custom_call.1} parent=1 // pred_check
      _
    $region11: #{tpu_custom_call.1} parent=1 // pred_check_branch
      %36 = sbr.rel (0) target = $region13
    $region12: #{tpu_custom_call.1} parent=1 // pred_region
      %s38 = ssub.s32 192, 192
      %39 = vsyncadd [#allocation6], %s38
      %s41 = sshll.u32 [#allocation7], 4
      %s42 = int_to_ptr.vmem [resolvable:$true] %s41
      %44 = dma.hbm_to_vmem [thread:$0]  %s2, 192, %s42, [#allocation6]
    $region13: #{tpu_custom_call.1} parent=1 // pred_fallthru
      _
    // Predicated region
    $region14: #{tpu_custom_call.1} parent=1 // pred_check
      _
    $region15: #{tpu_custom_call.1} parent=1 // pred_check_branch
      %46 = sbr.rel (0) target = $region17
    $region16: #{tpu_custom_call.1} parent=1 // pred_region
      %47 = dma.done [#allocation3], 1024
    $region17: #{tpu_custom_call.1} parent=1 // pred_fallthru
      _
    // Predicated region
    $region18: #{tpu_custom_call.1} parent=1 // pred_check
      _
    $region19: #{tpu_custom_call.1} parent=1 // pred_check_branch
      %49 = sbr.rel (0) target = $region21
    $region20: #{tpu_custom_call.1} parent=1 // pred_region
      %50 = dma.done [#allocation6], 49152
    $region21: #{tpu_custom_call.1} parent=1 // pred_fallthru
      _
    // Predicated region
    $region22: #{tpu_custom_call.1} parent=1 // pred_check
      _
    $region23: #{tpu_custom_call.1} parent=1 // pred_check_branch
      %52 = sbr.rel (0) target = $region25
    $region24: #{tpu_custom_call.1} parent=1 // pred_region
      %53 = dma.done [#allocation6], 192
    $region25: #{tpu_custom_call.1} parent=1 // pred_fallthru
      _
    %v54 = vld [vmem:[#allocation2] sm:$0xff]
    %v55 = vld [vmem:[#allocation2 + $0x8] sm:$0xff]
    %v56 = vld [vmem:[#allocation2 + $0x10] sm:$0xff]
    %v57 = vld [vmem:[#allocation2 + $0x18] sm:$0xff]
    %v58 = vld [vmem:[#allocation2 + $0x20] sm:$0xff]
    %v59 = vld [vmem:[#allocation2 + $0x28] sm:$0xff]
    %v60 = vld [vmem:[#allocation2 + $0x30] sm:$0xff]
    %v61 = vld [vmem:[#allocation2 + $0x38] sm:$0xff]
    %v62 = vpack.c.bf16 %v58, %v54
    %v63 = vpack.c.bf16 %v59, %v55
    %v64 = vpack.c.bf16 %v60, %v56
    %v65 = vpack.c.bf16 %v61, %v57
    %v66 = vld [vmem:[#allocation5] sm:$0xff]
    %v67 = vld [vmem:[#allocation5 + $0x8] sm:$0xff]
    %v68 = vld [vmem:[#allocation5 + $0x10] sm:$0xff]
    %v69 = vld [vmem:[#allocation5 + $0x18] sm:$0xff]
    %v70 = vld [vmem:[#allocation5 + $0x20] sm:$0xff]
    %v71 = vld [vmem:[#allocation5 + $0x28] sm:$0xff]
    %v72 = vld [vmem:[#allocation5 + $0x30] sm:$0xff]
    %v73 = vld [vmem:[#allocation5 + $0x38] sm:$0xff]
    %v74 = vld [vmem:[#allocation5 + $0x40] sm:$0xff]
    %v75 = vld [vmem:[#allocation5 + $0x48] sm:$0xff]
    %v76 = vld [vmem:[#allocation5 + $0x50] sm:$0xff]
    %v77 = vld [vmem:[#allocation5 + $0x58] sm:$0xff]
    %v78 = vld [vmem:[#allocation5 + $0x60] sm:$0xff]
    %v79 = vld [vmem:[#allocation5 + $0x68] sm:$0xff]
    %v80 = vld [vmem:[#allocation5 + $0x70] sm:$0xff]
    %v81 = vld [vmem:[#allocation5 + $0x78] sm:$0xff]
    %v82 = vld [vmem:[#allocation5 + $0x80] sm:$0xff]
    %v83 = vld [vmem:[#allocation5 + $0x88] sm:$0xff]
    %v84 = vld [vmem:[#allocation5 + $0x90] sm:$0xff]
    %v85 = vld [vmem:[#allocation5 + $0x98] sm:$0xff]
    %v86 = vld [vmem:[#allocation5 + $0xa0] sm:$0xff]
    %v87 = vld [vmem:[#allocation5 + $0xa8] sm:$0xff]
    %v88 = vld [vmem:[#allocation5 + $0xb0] sm:$0xff]
    %v89 = vld [vmem:[#allocation5 + $0xb8] sm:$0xff]
    %v90 = vld [vmem:[#allocation5 + $0xc0] sm:$0xff]
    %v91 = vld [vmem:[#allocation5 + $0xc8] sm:$0xff]
    %v92 = vld [vmem:[#allocation5 + $0xd0] sm:$0xff]
    %v93 = vld [vmem:[#allocation5 + $0xd8] sm:$0xff]
    %v94 = vld [vmem:[#allocation5 + $0xe0] sm:$0xff]
    %v95 = vld [vmem:[#allocation5 + $0xe8] sm:$0xff]
    %v96 = vld [vmem:[#allocation5 + $0xf0] sm:$0xff]
    %v97 = vld [vmem:[#allocation5 + $0xf8] sm:$0xff]
    %v98 = vld [vmem:[#allocation5 + $0x100] sm:$0xff]
    %v99 = vld [vmem:[#allocation5 + $0x108] sm:$0xff]
    %v100 = vld [vmem:[#allocation5 + $0x110] sm:$0xff]
    %v101 = vld [vmem:[#allocation5 + $0x118] sm:$0xff]
    %v102 = vld [vmem:[#allocation5 + $0x120] sm:$0xff]
    %v103 = vld [vmem:[#allocation5 + $0x128] sm:$0xff]
    %v104 = vld [vmem:[#allocation5 + $0x130] sm:$0xff]
    %v105 = vld [vmem:[#allocation5 + $0x138] sm:$0xff]
    %v106 = vld [vmem:[#allocation5 + $0x140] sm:$0xff]
    %v107 = vld [vmem:[#allocation5 + $0x148] sm:$0xff]
    %v108 = vld [vmem:[#allocation5 + $0x150] sm:$0xff]
    %v109 = vld [vmem:[#allocation5 + $0x158] sm:$0xff]
    %v110 = vld [vmem:[#allocation5 + $0x160] sm:$0xff]
    %v111 = vld [vmem:[#allocation5 + $0x168] sm:$0xff]
    %v112 = vld [vmem:[#allocation5 + $0x170] sm:$0xff]
    %v113 = vld [vmem:[#allocation5 + $0x178] sm:$0xff]
    %v114 = vld [vmem:[#allocation5 + $0x180] sm:$0xff]
    %v115 = vld [vmem:[#allocation5 + $0x188] sm:$0xff]
    %v116 = vld [vmem:[#allocation5 + $0x190] sm:$0xff]
    %v117 = vld [vmem:[#allocation5 + $0x198] sm:$0xff]
    %v118 = vld [vmem:[#allocation5 + $0x1a0] sm:$0xff]
    %v119 = vld [vmem:[#allocation5 + $0x1a8] sm:$0xff]
    %v120 = vld [vmem:[#allocation5 + $0x1b0] sm:$0xff]
    %v121 = vld [vmem:[#allocation5 + $0x1b8] sm:$0xff]
    %v122 = vld [vmem:[#allocation5 + $0x1c0] sm:$0xff]
    %v123 = vld [vmem:[#allocation5 + $0x1c8] sm:$0xff]
    %v124 = vld [vmem:[#allocation5 + $0x1d0] sm:$0xff]
    %v125 = vld [vmem:[#allocation5 + $0x1d8] sm:$0xff]
    %v126 = vld [vmem:[#allocation5 + $0x1e0] sm:$0xff]
    %v127 = vld [vmem:[#allocation5 + $0x1e8] sm:$0xff]
    %v128 = vld [vmem:[#allocation5 + $0x1f0] sm:$0xff]
    %v129 = vld [vmem:[#allocation5 + $0x1f8] sm:$0xff]
    %v130 = vld [vmem:[#allocation5 + $0x200] sm:$0xff]
    %v131 = vld [vmem:[#allocation5 + $0x208] sm:$0xff]
    %v132 = vld [vmem:[#allocation5 + $0x210] sm:$0xff]
    %v133 = vld [vmem:[#allocation5 + $0x218] sm:$0xff]
    %v134 = vld [vmem:[#allocation5 + $0x220] sm:$0xff]
    %v135 = vld [vmem:[#allocation5 + $0x228] sm:$0xff]
    %v136 = vld [vmem:[#allocation5 + $0x230] sm:$0xff]
    %v137 = vld [vmem:[#allocation5 + $0x238] sm:$0xff]
    %v138 = vld [vmem:[#allocation5 + $0x240] sm:$0xff]
    %v139 = vld [vmem:[#allocation5 + $0x248] sm:$0xff]
    %v140 = vld [vmem:[#allocation5 + $0x250] sm:$0xff]
    %v141 = vld [vmem:[#allocation5 + $0x258] sm:$0xff]
    %v142 = vld [vmem:[#allocation5 + $0x260] sm:$0xff]
    %v143 = vld [vmem:[#allocation5 + $0x268] sm:$0xff]
    %v144 = vld [vmem:[#allocation5 + $0x270] sm:$0xff]
    %v145 = vld [vmem:[#allocation5 + $0x278] sm:$0xff]
    %v146 = vld [vmem:[#allocation5 + $0x280] sm:$0xff]
    %v147 = vld [vmem:[#allocation5 + $0x288] sm:$0xff]
    %v148 = vld [vmem:[#allocation5 + $0x290] sm:$0xff]
    %v149 = vld [vmem:[#allocation5 + $0x298] sm:$0xff]
    %v150 = vld [vmem:[#allocation5 + $0x2a0] sm:$0xff]
    %v151 = vld [vmem:[#allocation5 + $0x2a8] sm:$0xff]
    %v152 = vld [vmem:[#allocation5 + $0x2b0] sm:$0xff]
    %v153 = vld [vmem:[#allocation5 + $0x2b8] sm:$0xff]
    %v154 = vld [vmem:[#allocation5 + $0x2c0] sm:$0xff]
    %v155 = vld [vmem:[#allocation5 + $0x2c8] sm:$0xff]
    %v156 = vld [vmem:[#allocation5 + $0x2d0] sm:$0xff]
    %v157 = vld [vmem:[#allocation5 + $0x2d8] sm:$0xff]
    %v158 = vld [vmem:[#allocation5 + $0x2e0] sm:$0xff]
    %v159 = vld [vmem:[#allocation5 + $0x2e8] sm:$0xff]
    %v160 = vld [vmem:[#allocation5 + $0x2f0] sm:$0xff]
    %v161 = vld [vmem:[#allocation5 + $0x2f8] sm:$0xff]
    %v162 = vld [vmem:[#allocation5 + $0x300] sm:$0xff]
    %v163 = vld [vmem:[#allocation5 + $0x308] sm:$0xff]
    %v164 = vld [vmem:[#allocation5 + $0x310] sm:$0xff]
    %v165 = vld [vmem:[#allocation5 + $0x318] sm:$0xff]
    %v166 = vld [vmem:[#allocation5 + $0x320] sm:$0xff]
    %v167 = vld [vmem:[#allocation5 + $0x328] sm:$0xff]
    %v168 = vld [vmem:[#allocation5 + $0x330] sm:$0xff]
    %v169 = vld [vmem:[#allocation5 + $0x338] sm:$0xff]
    %v170 = vld [vmem:[#allocation5 + $0x340] sm:$0xff]
    %v171 = vld [vmem:[#allocation5 + $0x348] sm:$0xff]
    %v172 = vld [vmem:[#allocation5 + $0x350] sm:$0xff]
    %v173 = vld [vmem:[#allocation5 + $0x358] sm:$0xff]
    %v174 = vld [vmem:[#allocation5 + $0x360] sm:$0xff]
    %v175 = vld [vmem:[#allocation5 + $0x368] sm:$0xff]
    %v176 = vld [vmem:[#allocation5 + $0x370] sm:$0xff]
    %v177 = vld [vmem:[#allocation5 + $0x378] sm:$0xff]
    %v178 = vld [vmem:[#allocation5 + $0x380] sm:$0xff]
    %v179 = vld [vmem:[#allocation5 + $0x388] sm:$0xff]
    %v180 = vld [vmem:[#allocation5 + $0x390] sm:$0xff]
    %v181 = vld [vmem:[#allocation5 + $0x398] sm:$0xff]
    %v182 = vld [vmem:[#allocation5 + $0x3a0] sm:$0xff]
    %v183 = vld [vmem:[#allocation5 + $0x3a8] sm:$0xff]
    %v184 = vld [vmem:[#allocation5 + $0x3b0] sm:$0xff]
    %v185 = vld [vmem:[#allocation5 + $0x3b8] sm:$0xff]
    %v186 = vld [vmem:[#allocation5 + $0x3c0] sm:$0xff]
    %v187 = vld [vmem:[#allocation5 + $0x3c8] sm:$0xff]
    %v188 = vld [vmem:[#allocation5 + $0x3d0] sm:$0xff]
    %v189 = vld [vmem:[#allocation5 + $0x3d8] sm:$0xff]
    %v190 = vld [vmem:[#allocation5 + $0x3e0] sm:$0xff]
    %v191 = vld [vmem:[#allocation5 + $0x3e8] sm:$0xff]
    %v192 = vld [vmem:[#allocation5 + $0x3f0] sm:$0xff]
    %v193 = vld [vmem:[#allocation5 + $0x3f8] sm:$0xff]
    %v194 = vld [vmem:[#allocation5 + $0x400] sm:$0xff]
    %v195 = vld [vmem:[#allocation5 + $0x408] sm:$0xff]
    %v196 = vld [vmem:[#allocation5 + $0x410] sm:$0xff]
    %v197 = vld [vmem:[#allocation5 + $0x418] sm:$0xff]
    %v198 = vld [vmem:[#allocation5 + $0x420] sm:$0xff]
    %v199 = vld [vmem:[#allocation5 + $0x428] sm:$0xff]
    %v200 = vld [vmem:[#allocation5 + $0x430] sm:$0xff]
    %v201 = vld [vmem:[#allocation5 + $0x438] sm:$0xff]
    %v202 = vld [vmem:[#allocation5 + $0x440] sm:$0xff]
    %v203 = vld [vmem:[#allocation5 + $0x448] sm:$0xff]
    %v204 = vld [vmem:[#allocation5 + $0x450] sm:$0xff]
    %v205 = vld [vmem:[#allocation5 + $0x458] sm:$0xff]
    %v206 = vld [vmem:[#allocation5 + $0x460] sm:$0xff]
    %v207 = vld [vmem:[#allocation5 + $0x468] sm:$0xff]
    %v208 = vld [vmem:[#allocation5 + $0x470] sm:$0xff]
    %v209 = vld [vmem:[#allocation5 + $0x478] sm:$0xff]
    %v210 = vld [vmem:[#allocation5 + $0x480] sm:$0xff]
    %v211 = vld [vmem:[#allocation5 + $0x488] sm:$0xff]
    %v212 = vld [vmem:[#allocation5 + $0x490] sm:$0xff]
    %v213 = vld [vmem:[#allocation5 + $0x498] sm:$0xff]
    %v214 = vld [vmem:[#allocation5 + $0x4a0] sm:$0xff]
    %v215 = vld [vmem:[#allocation5 + $0x4a8] sm:$0xff]
    %v216 = vld [vmem:[#allocation5 + $0x4b0] sm:$0xff]
    %v217 = vld [vmem:[#allocation5 + $0x4b8] sm:$0xff]
    %v218 = vld [vmem:[#allocation5 + $0x4c0] sm:$0xff]
    %v219 = vld [vmem:[#allocation5 + $0x4c8] sm:$0xff]
    %v220 = vld [vmem:[#allocation5 + $0x4d0] sm:$0xff]
    %v221 = vld [vmem:[#allocation5 + $0x4d8] sm:$0xff]
    %v222 = vld [vmem:[#allocation5 + $0x4e0] sm:$0xff]
    %v223 = vld [vmem:[#allocation5 + $0x4e8] sm:$0xff]
    %v224 = vld [vmem:[#allocation5 + $0x4f0] sm:$0xff]
    %v225 = vld [vmem:[#allocation5 + $0x4f8] sm:$0xff]
    %v226 = vld [vmem:[#allocation5 + $0x500] sm:$0xff]
    %v227 = vld [vmem:[#allocation5 + $0x508] sm:$0xff]
    %v228 = vld [vmem:[#allocation5 + $0x510] sm:$0xff]
    %v229 = vld [vmem:[#allocation5 + $0x518] sm:$0xff]
    %v230 = vld [vmem:[#allocation5 + $0x520] sm:$0xff]
    %v231 = vld [vmem:[#allocation5 + $0x528] sm:$0xff]
    %v232 = vld [vmem:[#allocation5 + $0x530] sm:$0xff]
    %v233 = vld [vmem:[#allocation5 + $0x538] sm:$0xff]
    %v234 = vld [vmem:[#allocation5 + $0x540] sm:$0xff]
    %v235 = vld [vmem:[#allocation5 + $0x548] sm:$0xff]
    %v236 = vld [vmem:[#allocation5 + $0x550] sm:$0xff]
    %v237 = vld [vmem:[#allocation5 + $0x558] sm:$0xff]
    %v238 = vld [vmem:[#allocation5 + $0x560] sm:$0xff]
    %v239 = vld [vmem:[#allocation5 + $0x568] sm:$0xff]
    %v240 = vld [vmem:[#allocation5 + $0x570] sm:$0xff]
    %v241 = vld [vmem:[#allocation5 + $0x578] sm:$0xff]
    %v242 = vld [vmem:[#allocation5 + $0x580] sm:$0xff]
    %v243 = vld [vmem:[#allocation5 + $0x588] sm:$0xff]
    %v244 = vld [vmem:[#allocation5 + $0x590] sm:$0xff]
    %v245 = vld [vmem:[#allocation5 + $0x598] sm:$0xff]
    %v246 = vld [vmem:[#allocation5 + $0x5a0] sm:$0xff]
    %v247 = vld [vmem:[#allocation5 + $0x5a8] sm:$0xff]
    %v248 = vld [vmem:[#allocation5 + $0x5b0] sm:$0xff]
    %v249 = vld [vmem:[#allocation5 + $0x5b8] sm:$0xff]
    %v250 = vld [vmem:[#allocation5 + $0x5c0] sm:$0xff]
    %v251 = vld [vmem:[#allocation5 + $0x5c8] sm:$0xff]
    %v252 = vld [vmem:[#allocation5 + $0x5d0] sm:$0xff]
    %v253 = vld [vmem:[#allocation5 + $0x5d8] sm:$0xff]
    %v254 = vld [vmem:[#allocation5 + $0x5e0] sm:$0xff]
    %v255 = vld [vmem:[#allocation5 + $0x5e8] sm:$0xff]
    %v256 = vld [vmem:[#allocation5 + $0x5f0] sm:$0xff]
    %v257 = vld [vmem:[#allocation5 + $0x5f8] sm:$0xff]
    %v258 = vld [vmem:[#allocation5 + $0x600] sm:$0xff]
    %v259 = vld [vmem:[#allocation5 + $0x608] sm:$0xff]
    %v260 = vld [vmem:[#allocation5 + $0x610] sm:$0xff]
    %v261 = vld [vmem:[#allocation5 + $0x618] sm:$0xff]
    %v262 = vld [vmem:[#allocation5 + $0x620] sm:$0xff]
    %v263 = vld [vmem:[#allocation5 + $0x628] sm:$0xff]
    %v264 = vld [vmem:[#allocation5 + $0x630] sm:$0xff]
    %v265 = vld [vmem:[#allocation5 + $0x638] sm:$0xff]
    %v266 = vld [vmem:[#allocation5 + $0x640] sm:$0xff]
    %v267 = vld [vmem:[#allocation5 + $0x648] sm:$0xff]
    %v268 = vld [vmem:[#allocation5 + $0x650] sm:$0xff]
    %v269 = vld [vmem:[#allocation5 + $0x658] sm:$0xff]
    %v270 = vld [vmem:[#allocation5 + $0x660] sm:$0xff]
    %v271 = vld [vmem:[#allocation5 + $0x668] sm:$0xff]
    %v272 = vld [vmem:[#allocation5 + $0x670] sm:$0xff]
    %v273 = vld [vmem:[#allocation5 + $0x678] sm:$0xff]
    %v274 = vld [vmem:[#allocation5 + $0x680] sm:$0xff]
    %v275 = vld [vmem:[#allocation5 + $0x688] sm:$0xff]
    %v276 = vld [vmem:[#allocation5 + $0x690] sm:$0xff]
    %v277 = vld [vmem:[#allocation5 + $0x698] sm:$0xff]
    %v278 = vld [vmem:[#allocation5 + $0x6a0] sm:$0xff]
    %v279 = vld [vmem:[#allocation5 + $0x6a8] sm:$0xff]
    %v280 = vld [vmem:[#allocation5 + $0x6b0] sm:$0xff]
    %v281 = vld [vmem:[#allocation5 + $0x6b8] sm:$0xff]
    %v282 = vld [vmem:[#allocation5 + $0x6c0] sm:$0xff]
    %v283 = vld [vmem:[#allocation5 + $0x6c8] sm:$0xff]
    %v284 = vld [vmem:[#allocation5 + $0x6d0] sm:$0xff]
    %v285 = vld [vmem:[#allocation5 + $0x6d8] sm:$0xff]
    %v286 = vld [vmem:[#allocation5 + $0x6e0] sm:$0xff]
    %v287 = vld [vmem:[#allocation5 + $0x6e8] sm:$0xff]
    %v288 = vld [vmem:[#allocation5 + $0x6f0] sm:$0xff]
    %v289 = vld [vmem:[#allocation5 + $0x6f8] sm:$0xff]
    %v290 = vld [vmem:[#allocation5 + $0x700] sm:$0xff]
    %v291 = vld [vmem:[#allocation5 + $0x708] sm:$0xff]
    %v292 = vld [vmem:[#allocation5 + $0x710] sm:$0xff]
    %v293 = vld [vmem:[#allocation5 + $0x718] sm:$0xff]
    %v294 = vld [vmem:[#allocation5 + $0x720] sm:$0xff]
    %v295 = vld [vmem:[#allocation5 + $0x728] sm:$0xff]
    %v296 = vld [vmem:[#allocation5 + $0x730] sm:$0xff]
    %v297 = vld [vmem:[#allocation5 + $0x738] sm:$0xff]
    %v298 = vld [vmem:[#allocation5 + $0x740] sm:$0xff]
    %v299 = vld [vmem:[#allocation5 + $0x748] sm:$0xff]
    %v300 = vld [vmem:[#allocation5 + $0x750] sm:$0xff]
    %v301 = vld [vmem:[#allocation5 + $0x758] sm:$0xff]
    %v302 = vld [vmem:[#allocation5 + $0x760] sm:$0xff]
    %v303 = vld [vmem:[#allocation5 + $0x768] sm:$0xff]
    %v304 = vld [vmem:[#allocation5 + $0x770] sm:$0xff]
    %v305 = vld [vmem:[#allocation5 + $0x778] sm:$0xff]
    %v306 = vld [vmem:[#allocation5 + $0x780] sm:$0xff]
    %v307 = vld [vmem:[#allocation5 + $0x788] sm:$0xff]
    %v308 = vld [vmem:[#allocation5 + $0x790] sm:$0xff]
    %v309 = vld [vmem:[#allocation5 + $0x798] sm:$0xff]
    %v310 = vld [vmem:[#allocation5 + $0x7a0] sm:$0xff]
    %v311 = vld [vmem:[#allocation5 + $0x7a8] sm:$0xff]
    %v312 = vld [vmem:[#allocation5 + $0x7b0] sm:$0xff]
    %v313 = vld [vmem:[#allocation5 + $0x7b8] sm:$0xff]
    %v314 = vld [vmem:[#allocation5 + $0x7c0] sm:$0xff]
    %v315 = vld [vmem:[#allocation5 + $0x7c8] sm:$0xff]
    %v316 = vld [vmem:[#allocation5 + $0x7d0] sm:$0xff]
    %v317 = vld [vmem:[#allocation5 + $0x7d8] sm:$0xff]
    %v318 = vld [vmem:[#allocation5 + $0x7e0] sm:$0xff]
    %v319 = vld [vmem:[#allocation5 + $0x7e8] sm:$0xff]
    %v320 = vld [vmem:[#allocation5 + $0x7f0] sm:$0xff]
    %v321 = vld [vmem:[#allocation5 + $0x7f8] sm:$0xff]
    %v322 = vld [vmem:[#allocation5 + $0x800] sm:$0xff]
    %v323 = vld [vmem:[#allocation5 + $0x808] sm:$0xff]
    %v324 = vld [vmem:[#allocation5 + $0x810] sm:$0xff]
    %v325 = vld [vmem:[#allocation5 + $0x818] sm:$0xff]
    %v326 = vld [vmem:[#allocation5 + $0x820] sm:$0xff]
    %v327 = vld [vmem:[#allocation5 + $0x828] sm:$0xff]
    %v328 = vld [vmem:[#allocation5 + $0x830] sm:$0xff]
    %v329 = vld [vmem:[#allocation5 + $0x838] sm:$0xff]
    %v330 = vld [vmem:[#allocation5 + $0x840] sm:$0xff]
    %v331 = vld [vmem:[#allocation5 + $0x848] sm:$0xff]
    %v332 = vld [vmem:[#allocation5 + $0x850] sm:$0xff]
    %v333 = vld [vmem:[#allocation5 + $0x858] sm:$0xff]
    %v334 = vld [vmem:[#allocation5 + $0x860] sm:$0xff]
    %v335 = vld [vmem:[#allocation5 + $0x868] sm:$0xff]
    %v336 = vld [vmem:[#allocation5 + $0x870] sm:$0xff]
    %v337 = vld [vmem:[#allocation5 + $0x878] sm:$0xff]
    %v338 = vld [vmem:[#allocation5 + $0x880] sm:$0xff]
    %v339 = vld [vmem:[#allocation5 + $0x888] sm:$0xff]
    %v340 = vld [vmem:[#allocation5 + $0x890] sm:$0xff]
    %v341 = vld [vmem:[#allocation5 + $0x898] sm:$0xff]
    %v342 = vld [vmem:[#allocation5 + $0x8a0] sm:$0xff]
    %v343 = vld [vmem:[#allocation5 + $0x8a8] sm:$0xff]
    %v344 = vld [vmem:[#allocation5 + $0x8b0] sm:$0xff]
    %v345 = vld [vmem:[#allocation5 + $0x8b8] sm:$0xff]
    %v346 = vld [vmem:[#allocation5 + $0x8c0] sm:$0xff]
    %v347 = vld [vmem:[#allocation5 + $0x8c8] sm:$0xff]
    %v348 = vld [vmem:[#allocation5 + $0x8d0] sm:$0xff]
    %v349 = vld [vmem:[#allocation5 + $0x8d8] sm:$0xff]
    %v350 = vld [vmem:[#allocation5 + $0x8e0] sm:$0xff]
    %v351 = vld [vmem:[#allocation5 + $0x8e8] sm:$0xff]
    %v352 = vld [vmem:[#allocation5 + $0x8f0] sm:$0xff]
    %v353 = vld [vmem:[#allocation5 + $0x8f8] sm:$0xff]
    %v354 = vld [vmem:[#allocation5 + $0x900] sm:$0xff]
    %v355 = vld [vmem:[#allocation5 + $0x908] sm:$0xff]
    %v356 = vld [vmem:[#allocation5 + $0x910] sm:$0xff]
    %v357 = vld [vmem:[#allocation5 + $0x918] sm:$0xff]
    %v358 = vld [vmem:[#allocation5 + $0x920] sm:$0xff]
    %v359 = vld [vmem:[#allocation5 + $0x928] sm:$0xff]
    %v360 = vld [vmem:[#allocation5 + $0x930] sm:$0xff]
    %v361 = vld [vmem:[#allocation5 + $0x938] sm:$0xff]
    %v362 = vld [vmem:[#allocation5 + $0x940] sm:$0xff]
    %v363 = vld [vmem:[#allocation5 + $0x948] sm:$0xff]
    %v364 = vld [vmem:[#allocation5 + $0x950] sm:$0xff]
    %v365 = vld [vmem:[#allocation5 + $0x958] sm:$0xff]
    %v366 = vld [vmem:[#allocation5 + $0x960] sm:$0xff]
    %v367 = vld [vmem:[#allocation5 + $0x968] sm:$0xff]
    %v368 = vld [vmem:[#allocation5 + $0x970] sm:$0xff]
    %v369 = vld [vmem:[#allocation5 + $0x978] sm:$0xff]
    %v370 = vld [vmem:[#allocation5 + $0x980] sm:$0xff]
    %v371 = vld [vmem:[#allocation5 + $0x988] sm:$0xff]
    %v372 = vld [vmem:[#allocation5 + $0x990] sm:$0xff]
    %v373 = vld [vmem:[#allocation5 + $0x998] sm:$0xff]
    %v374 = vld [vmem:[#allocation5 + $0x9a0] sm:$0xff]
    %v375 = vld [vmem:[#allocation5 + $0x9a8] sm:$0xff]
    %v376 = vld [vmem:[#allocation5 + $0x9b0] sm:$0xff]
    %v377 = vld [vmem:[#allocation5 + $0x9b8] sm:$0xff]
    %v378 = vld [vmem:[#allocation5 + $0x9c0] sm:$0xff]
    %v379 = vld [vmem:[#allocation5 + $0x9c8] sm:$0xff]
    %v380 = vld [vmem:[#allocation5 + $0x9d0] sm:$0xff]
    %v381 = vld [vmem:[#allocation5 + $0x9d8] sm:$0xff]
    %v382 = vld [vmem:[#allocation5 + $0x9e0] sm:$0xff]
    %v383 = vld [vmem:[#allocation5 + $0x9e8] sm:$0xff]
    %v384 = vld [vmem:[#allocation5 + $0x9f0] sm:$0xff]
    %v385 = vld [vmem:[#allocation5 + $0x9f8] sm:$0xff]
    %v386 = vld [vmem:[#allocation5 + $0xa00] sm:$0xff]
    %v387 = vld [vmem:[#allocation5 + $0xa08] sm:$0xff]
    %v388 = vld [vmem:[#allocation5 + $0xa10] sm:$0xff]
    %v389 = vld [vmem:[#allocation5 + $0xa18] sm:$0xff]
    %v390 = vld [vmem:[#allocation5 + $0xa20] sm:$0xff]
    %v391 = vld [vmem:[#allocation5 + $0xa28] sm:$0xff]
    %v392 = vld [vmem:[#allocation5 + $0xa30] sm:$0xff]
    %v393 = vld [vmem:[#allocation5 + $0xa38] sm:$0xff]
    %v394 = vld [vmem:[#allocation5 + $0xa40] sm:$0xff]
    %v395 = vld [vmem:[#allocation5 + $0xa48] sm:$0xff]
    %v396 = vld [vmem:[#allocation5 + $0xa50] sm:$0xff]
    %v397 = vld [vmem:[#allocation5 + $0xa58] sm:$0xff]
    %v398 = vld [vmem:[#allocation5 + $0xa60] sm:$0xff]
    %v399 = vld [vmem:[#allocation5 + $0xa68] sm:$0xff]
    %v400 = vld [vmem:[#allocation5 + $0xa70] sm:$0xff]
    %v401 = vld [vmem:[#allocation5 + $0xa78] sm:$0xff]
    %v402 = vld [vmem:[#allocation5 + $0xa80] sm:$0xff]
    %v403 = vld [vmem:[#allocation5 + $0xa88] sm:$0xff]
    %v404 = vld [vmem:[#allocation5 + $0xa90] sm:$0xff]
    %v405 = vld [vmem:[#allocation5 + $0xa98] sm:$0xff]
    %v406 = vld [vmem:[#allocation5 + $0xaa0] sm:$0xff]
    %v407 = vld [vmem:[#allocation5 + $0xaa8] sm:$0xff]
    %v408 = vld [vmem:[#allocation5 + $0xab0] sm:$0xff]
    %v409 = vld [vmem:[#allocation5 + $0xab8] sm:$0xff]
    %v410 = vld [vmem:[#allocation5 + $0xac0] sm:$0xff]
    %v411 = vld [vmem:[#allocation5 + $0xac8] sm:$0xff]
    %v412 = vld [vmem:[#allocation5 + $0xad0] sm:$0xff]
    %v413 = vld [vmem:[#allocation5 + $0xad8] sm:$0xff]
    %v414 = vld [vmem:[#allocation5 + $0xae0] sm:$0xff]
    %v415 = vld [vmem:[#allocation5 + $0xae8] sm:$0xff]
    %v416 = vld [vmem:[#allocation5 + $0xaf0] sm:$0xff]
    %v417 = vld [vmem:[#allocation5 + $0xaf8] sm:$0xff]
    %v418 = vld [vmem:[#allocation5 + $0xb00] sm:$0xff]
    %v419 = vld [vmem:[#allocation5 + $0xb08] sm:$0xff]
    %v420 = vld [vmem:[#allocation5 + $0xb10] sm:$0xff]
    %v421 = vld [vmem:[#allocation5 + $0xb18] sm:$0xff]
    %v422 = vld [vmem:[#allocation5 + $0xb20] sm:$0xff]
    %v423 = vld [vmem:[#allocation5 + $0xb28] sm:$0xff]
    %v424 = vld [vmem:[#allocation5 + $0xb30] sm:$0xff]
    %v425 = vld [vmem:[#allocation5 + $0xb38] sm:$0xff]
    %v426 = vld [vmem:[#allocation5 + $0xb40] sm:$0xff]
    %v427 = vld [vmem:[#allocation5 + $0xb48] sm:$0xff]
    %v428 = vld [vmem:[#allocation5 + $0xb50] sm:$0xff]
    %v429 = vld [vmem:[#allocation5 + $0xb58] sm:$0xff]
    %v430 = vld [vmem:[#allocation5 + $0xb60] sm:$0xff]
    %v431 = vld [vmem:[#allocation5 + $0xb68] sm:$0xff]
    %v432 = vld [vmem:[#allocation5 + $0xb70] sm:$0xff]
    %v433 = vld [vmem:[#allocation5 + $0xb78] sm:$0xff]
    %v434 = vld [vmem:[#allocation5 + $0xb80] sm:$0xff]
    %v435 = vld [vmem:[#allocation5 + $0xb88] sm:$0xff]
    %v436 = vld [vmem:[#allocation5 + $0xb90] sm:$0xff]
    %v437 = vld [vmem:[#allocation5 + $0xb98] sm:$0xff]
    %v438 = vld [vmem:[#allocation5 + $0xba0] sm:$0xff]
    %v439 = vld [vmem:[#allocation5 + $0xba8] sm:$0xff]
    %v440 = vld [vmem:[#allocation5 + $0xbb0] sm:$0xff]
    %v441 = vld [vmem:[#allocation5 + $0xbb8] sm:$0xff]
    %v442 = vld [vmem:[#allocation5 + $0xbc0] sm:$0xff]
    %v443 = vld [vmem:[#allocation5 + $0xbc8] sm:$0xff]
    %v444 = vld [vmem:[#allocation5 + $0xbd0] sm:$0xff]
    %v445 = vld [vmem:[#allocation5 + $0xbd8] sm:$0xff]
    %v446 = vld [vmem:[#allocation5 + $0xbe0] sm:$0xff]
    %v447 = vld [vmem:[#allocation5 + $0xbe8] sm:$0xff]
    %v448 = vld [vmem:[#allocation5 + $0xbf0] sm:$0xff]
    %v449 = vld [vmem:[#allocation5 + $0xbf8] sm:$0xff]
    %v450 = vld [vmem:[#allocation7] sm:$0xff]
    %v451 = vld [vmem:[#allocation7 + $0x8] sm:$0xf]
    %v454 = vlaneseq
    %v455 = vshrl.u32 %v454, 7
    %v456 = vsub.s32 0, %v455
    %v457 = vrot.slane %v450, %v456
    %v458 = vlaneseq
    %v459 = vshrl.u32 %v458, 7
    %v460 = vsub.s32 1, %v459
    %v461 = vrot.slane %v450, %v460
    %v462 = vlaneseq
    %v463 = vshrl.u32 %v462, 7
    %v464 = vsub.s32 2, %v463
    %v465 = vrot.slane %v450, %v464
    %v466 = vlaneseq
    %v467 = vshrl.u32 %v466, 7
    %v468 = vsub.s32 3, %v467
    %v469 = vrot.slane %v450, %v468
    %v470 = vlaneseq
    %v471 = vshrl.u32 %v470, 7
    %v472 = vsub.s32 4, %v471
    %v473 = vrot.slane %v450, %v472
    %v474 = vlaneseq
    %v475 = vshrl.u32 %v474, 7
    %v476 = vsub.s32 5, %v475
    %v477 = vrot.slane %v450, %v476
    %v478 = vlaneseq
    %v479 = vshrl.u32 %v478, 7
    %v480 = vsub.s32 6, %v479
    %v481 = vrot.slane %v450, %v480
    %v482 = vlaneseq
    %v483 = vshrl.u32 %v482, 7
    %v484 = vsub.s32 7, %v483
    %v485 = vrot.slane %v450, %v484
    %v486 = vlaneseq
    %v487 = vshrl.u32 %v486, 7
    %v488 = vsub.s32 0, %v487
    %v489 = vrot.slane %v451, %v488
    %v490 = vlaneseq
    %v491 = vshrl.u32 %v490, 7
    %v492 = vsub.s32 1, %v491
    %v493 = vrot.slane %v451, %v492
    %v494 = vlaneseq
    %v495 = vshrl.u32 %v494, 7
    %v496 = vsub.s32 2, %v495
    %v497 = vrot.slane %v451, %v496
    %v498 = vlaneseq
    %v499 = vshrl.u32 %v498, 7
    %v500 = vsub.s32 3, %v499
    %v501 = vrot.slane %v451, %v500
    %v898 = vunpack.c.l.b16 %v66
    %v899 = vunpack.c.h.b16 %v66
    %v900 = vunpack.c.l.b16 %v67
    %v901 = vunpack.c.h.b16 %v67
    %v902 = vunpack.c.l.b16 %v68
    %v903 = vunpack.c.h.b16 %v68
    %v904 = vunpack.c.l.b16 %v69
    %v905 = vunpack.c.h.b16 %v69
    %v906 = vunpack.c.l.b16 %v70
    %v907 = vunpack.c.h.b16 %v70
    %v908 = vunpack.c.l.b16 %v71
    %v909 = vunpack.c.h.b16 %v71
    %v910 = vunpack.c.l.b16 %v72
    %v911 = vunpack.c.h.b16 %v72
    %v912 = vunpack.c.l.b16 %v73
    %v913 = vunpack.c.h.b16 %v73
    %v914 = vunpack.c.l.b16 %v74
    %v915 = vunpack.c.h.b16 %v74
    %v916 = vunpack.c.l.b16 %v75
    %v917 = vunpack.c.h.b16 %v75
    %v918 = vunpack.c.l.b16 %v76
    %v919 = vunpack.c.h.b16 %v76
    %v920 = vunpack.c.l.b16 %v77
    %v921 = vunpack.c.h.b16 %v77
    %v922 = vunpack.c.l.b16 %v78
    %v923 = vunpack.c.h.b16 %v78
    %v924 = vunpack.c.l.b16 %v79
    %v925 = vunpack.c.h.b16 %v79
    %v926 = vunpack.c.l.b16 %v80
    %v927 = vunpack.c.h.b16 %v80
    %v928 = vunpack.c.l.b16 %v81
    %v929 = vunpack.c.h.b16 %v81
    %v930 = vunpack.c.l.b16 %v82
    %v931 = vunpack.c.h.b16 %v82
    %v932 = vunpack.c.l.b16 %v83
    %v933 = vunpack.c.h.b16 %v83
    %v934 = vunpack.c.l.b16 %v84
    %v935 = vunpack.c.h.b16 %v84
    %v936 = vunpack.c.l.b16 %v85
    %v937 = vunpack.c.h.b16 %v85
    %v938 = vunpack.c.l.b16 %v86
    %v939 = vunpack.c.h.b16 %v86
    %v940 = vunpack.c.l.b16 %v87
    %v941 = vunpack.c.h.b16 %v87
    %v942 = vunpack.c.l.b16 %v88
    %v943 = vunpack.c.h.b16 %v88
    %v944 = vunpack.c.l.b16 %v89
    %v945 = vunpack.c.h.b16 %v89
    %v946 = vunpack.c.l.b16 %v90
    %v947 = vunpack.c.h.b16 %v90
    %v948 = vunpack.c.l.b16 %v91
    %v949 = vunpack.c.h.b16 %v91
    %v950 = vunpack.c.l.b16 %v92
    %v951 = vunpack.c.h.b16 %v92
    %v952 = vunpack.c.l.b16 %v93
    %v953 = vunpack.c.h.b16 %v93
    %v954 = vunpack.c.l.b16 %v94
    %v955 = vunpack.c.h.b16 %v94
    %v956 = vunpack.c.l.b16 %v95
    %v957 = vunpack.c.h.b16 %v95
    %v958 = vunpack.c.l.b16 %v96
    %v959 = vunpack.c.h.b16 %v96
    %v960 = vunpack.c.l.b16 %v97
    %v961 = vunpack.c.h.b16 %v97
    %v962 = vunpack.c.l.b16 %v98
    %v963 = vunpack.c.h.b16 %v98
    %v964 = vunpack.c.l.b16 %v99
    %v965 = vunpack.c.h.b16 %v99
    %v966 = vunpack.c.l.b16 %v100
    %v967 = vunpack.c.h.b16 %v100
    %v968 = vunpack.c.l.b16 %v101
    %v969 = vunpack.c.h.b16 %v101
    %v970 = vunpack.c.l.b16 %v102
    %v971 = vunpack.c.h.b16 %v102
    %v972 = vunpack.c.l.b16 %v103
    %v973 = vunpack.c.h.b16 %v103
    %v974 = vunpack.c.l.b16 %v104
    %v975 = vunpack.c.h.b16 %v104
    %v976 = vunpack.c.l.b16 %v105
    %v977 = vunpack.c.h.b16 %v105
    %v978 = vunpack.c.l.b16 %v106
    %v979 = vunpack.c.h.b16 %v106
    %v980 = vunpack.c.l.b16 %v107
    %v981 = vunpack.c.h.b16 %v107
    %v982 = vunpack.c.l.b16 %v108
    %v983 = vunpack.c.h.b16 %v108
    %v984 = vunpack.c.l.b16 %v109
    %v985 = vunpack.c.h.b16 %v109
    %v986 = vunpack.c.l.b16 %v110
    %v987 = vunpack.c.h.b16 %v110
    %v988 = vunpack.c.l.b16 %v111
    %v989 = vunpack.c.h.b16 %v111
    %v990 = vunpack.c.l.b16 %v112
    %v991 = vunpack.c.h.b16 %v112
    %v992 = vunpack.c.l.b16 %v113
    %v993 = vunpack.c.h.b16 %v113
    %v994 = vunpack.c.l.b16 %v114
    %v995 = vunpack.c.h.b16 %v114
    %v996 = vunpack.c.l.b16 %v115
    %v997 = vunpack.c.h.b16 %v115
    %v998 = vunpack.c.l.b16 %v116
    %v999 = vunpack.c.h.b16 %v116
    %v1000 = vunpack.c.l.b16 %v117
    %v1001 = vunpack.c.h.b16 %v117
    %v1002 = vunpack.c.l.b16 %v118
    %v1003 = vunpack.c.h.b16 %v118
    %v1004 = vunpack.c.l.b16 %v119
    %v1005 = vunpack.c.h.b16 %v119
    %v1006 = vunpack.c.l.b16 %v120
    %v1007 = vunpack.c.h.b16 %v120
    %v1008 = vunpack.c.l.b16 %v121
    %v1009 = vunpack.c.h.b16 %v121
    %v1010 = vunpack.c.l.b16 %v122
    %v1011 = vunpack.c.h.b16 %v122
    %v1012 = vunpack.c.l.b16 %v123
    %v1013 = vunpack.c.h.b16 %v123
    %v1014 = vunpack.c.l.b16 %v124
    %v1015 = vunpack.c.h.b16 %v124
    %v1016 = vunpack.c.l.b16 %v125
    %v1017 = vunpack.c.h.b16 %v125
    %v1018 = vunpack.c.l.b16 %v126
    %v1019 = vunpack.c.h.b16 %v126
    %v1020 = vunpack.c.l.b16 %v127
    %v1021 = vunpack.c.h.b16 %v127
    %v1022 = vunpack.c.l.b16 %v128
    %v1023 = vunpack.c.h.b16 %v128
    %v1024 = vunpack.c.l.b16 %v129
    %v1025 = vunpack.c.h.b16 %v129
    %v1026 = vunpack.c.l.b16 %v130
    %v1027 = vunpack.c.h.b16 %v130
    %v1028 = vunpack.c.l.b16 %v131
    %v1029 = vunpack.c.h.b16 %v131
    %v1030 = vunpack.c.l.b16 %v132
    %v1031 = vunpack.c.h.b16 %v132
    %v1032 = vunpack.c.l.b16 %v133
    %v1033 = vunpack.c.h.b16 %v133
    %v1034 = vunpack.c.l.b16 %v134
    %v1035 = vunpack.c.h.b16 %v134
    %v1036 = vunpack.c.l.b16 %v135
    %v1037 = vunpack.c.h.b16 %v135
    %v1038 = vunpack.c.l.b16 %v136
    %v1039 = vunpack.c.h.b16 %v136
    %v1040 = vunpack.c.l.b16 %v137
    %v1041 = vunpack.c.h.b16 %v137
    %v1042 = vunpack.c.l.b16 %v138
    %v1043 = vunpack.c.h.b16 %v138
    %v1044 = vunpack.c.l.b16 %v139
    %v1045 = vunpack.c.h.b16 %v139
    %v1046 = vunpack.c.l.b16 %v140
    %v1047 = vunpack.c.h.b16 %v140
    %v1048 = vunpack.c.l.b16 %v141
    %v1049 = vunpack.c.h.b16 %v141
    %v1050 = vunpack.c.l.b16 %v142
    %v1051 = vunpack.c.h.b16 %v142
    %v1052 = vunpack.c.l.b16 %v143
    %v1053 = vunpack.c.h.b16 %v143
    %v1054 = vunpack.c.l.b16 %v144
    %v1055 = vunpack.c.h.b16 %v144
    %v1056 = vunpack.c.l.b16 %v145
    %v1057 = vunpack.c.h.b16 %v145
    %v1058 = vunpack.c.l.b16 %v146
    %v1059 = vunpack.c.h.b16 %v146
    %v1060 = vunpack.c.l.b16 %v147
    %v1061 = vunpack.c.h.b16 %v147
    %v1062 = vunpack.c.l.b16 %v148
    %v1063 = vunpack.c.h.b16 %v148
    %v1064 = vunpack.c.l.b16 %v149
    %v1065 = vunpack.c.h.b16 %v149
    %v1066 = vunpack.c.l.b16 %v150
    %v1067 = vunpack.c.h.b16 %v150
    %v1068 = vunpack.c.l.b16 %v151
    %v1069 = vunpack.c.h.b16 %v151
    %v1070 = vunpack.c.l.b16 %v152
    %v1071 = vunpack.c.h.b16 %v152
    %v1072 = vunpack.c.l.b16 %v153
    %v1073 = vunpack.c.h.b16 %v153
    %v1074 = vunpack.c.l.b16 %v154
    %v1075 = vunpack.c.h.b16 %v154
    %v1076 = vunpack.c.l.b16 %v155
    %v1077 = vunpack.c.h.b16 %v155
    %v1078 = vunpack.c.l.b16 %v156
    %v1079 = vunpack.c.h.b16 %v156
    %v1080 = vunpack.c.l.b16 %v157
    %v1081 = vunpack.c.h.b16 %v157
    %v1082 = vunpack.c.l.b16 %v158
    %v1083 = vunpack.c.h.b16 %v158
    %v1084 = vunpack.c.l.b16 %v159
    %v1085 = vunpack.c.h.b16 %v159
    %v1086 = vunpack.c.l.b16 %v160
    %v1087 = vunpack.c.h.b16 %v160
    %v1088 = vunpack.c.l.b16 %v161
    %v1089 = vunpack.c.h.b16 %v161
    %v1090 = vunpack.c.l.b16 %v162
    %v1091 = vunpack.c.h.b16 %v162
    %v1092 = vunpack.c.l.b16 %v163
    %v1093 = vunpack.c.h.b16 %v163
    %v1094 = vunpack.c.l.b16 %v164
    %v1095 = vunpack.c.h.b16 %v164
    %v1096 = vunpack.c.l.b16 %v165
    %v1097 = vunpack.c.h.b16 %v165
    %v1098 = vunpack.c.l.b16 %v166
    %v1099 = vunpack.c.h.b16 %v166
    %v1100 = vunpack.c.l.b16 %v167
    %v1101 = vunpack.c.h.b16 %v167
    %v1102 = vunpack.c.l.b16 %v168
    %v1103 = vunpack.c.h.b16 %v168
    %v1104 = vunpack.c.l.b16 %v169
    %v1105 = vunpack.c.h.b16 %v169
    %v1106 = vunpack.c.l.b16 %v170
    %v1107 = vunpack.c.h.b16 %v170
    %v1108 = vunpack.c.l.b16 %v171
    %v1109 = vunpack.c.h.b16 %v171
    %v1110 = vunpack.c.l.b16 %v172
    %v1111 = vunpack.c.h.b16 %v172
    %v1112 = vunpack.c.l.b16 %v173
    %v1113 = vunpack.c.h.b16 %v173
    %v1114 = vunpack.c.l.b16 %v174
    %v1115 = vunpack.c.h.b16 %v174
    %v1116 = vunpack.c.l.b16 %v175
    %v1117 = vunpack.c.h.b16 %v175
    %v1118 = vunpack.c.l.b16 %v176
    %v1119 = vunpack.c.h.b16 %v176
    %v1120 = vunpack.c.l.b16 %v177
    %v1121 = vunpack.c.h.b16 %v177
    %v1122 = vunpack.c.l.b16 %v178
    %v1123 = vunpack.c.h.b16 %v178
    %v1124 = vunpack.c.l.b16 %v179
    %v1125 = vunpack.c.h.b16 %v179
    %v1126 = vunpack.c.l.b16 %v180
    %v1127 = vunpack.c.h.b16 %v180
    %v1128 = vunpack.c.l.b16 %v181
    %v1129 = vunpack.c.h.b16 %v181
    %v1130 = vunpack.c.l.b16 %v182
    %v1131 = vunpack.c.h.b16 %v182
    %v1132 = vunpack.c.l.b16 %v183
    %v1133 = vunpack.c.h.b16 %v183
    %v1134 = vunpack.c.l.b16 %v184
    %v1135 = vunpack.c.h.b16 %v184
    %v1136 = vunpack.c.l.b16 %v185
    %v1137 = vunpack.c.h.b16 %v185
    %v1138 = vunpack.c.l.b16 %v186
    %v1139 = vunpack.c.h.b16 %v186
    %v1140 = vunpack.c.l.b16 %v187
    %v1141 = vunpack.c.h.b16 %v187
    %v1142 = vunpack.c.l.b16 %v188
    %v1143 = vunpack.c.h.b16 %v188
    %v1144 = vunpack.c.l.b16 %v189
    %v1145 = vunpack.c.h.b16 %v189
    %v1146 = vunpack.c.l.b16 %v190
    %v1147 = vunpack.c.h.b16 %v190
    %v1148 = vunpack.c.l.b16 %v191
    %v1149 = vunpack.c.h.b16 %v191
    %v1150 = vunpack.c.l.b16 %v192
    %v1151 = vunpack.c.h.b16 %v192
    %v1152 = vunpack.c.l.b16 %v193
    %v1153 = vunpack.c.h.b16 %v193
    %v1154 = vunpack.c.l.b16 %v194
    %v1155 = vunpack.c.h.b16 %v194
    %v1156 = vunpack.c.l.b16 %v195
    %v1157 = vunpack.c.h.b16 %v195
    %v1158 = vunpack.c.l.b16 %v196
    %v1159 = vunpack.c.h.b16 %v196
    %v1160 = vunpack.c.l.b16 %v197
    %v1161 = vunpack.c.h.b16 %v197
    %v1162 = vunpack.c.l.b16 %v198
    %v1163 = vunpack.c.h.b16 %v198
    %v1164 = vunpack.c.l.b16 %v199
    %v1165 = vunpack.c.h.b16 %v199
    %v1166 = vunpack.c.l.b16 %v200
    %v1167 = vunpack.c.h.b16 %v200
    %v1168 = vunpack.c.l.b16 %v201
    %v1169 = vunpack.c.h.b16 %v201
    %v1170 = vunpack.c.l.b16 %v202
    %v1171 = vunpack.c.h.b16 %v202
    %v1172 = vunpack.c.l.b16 %v203
    %v1173 = vunpack.c.h.b16 %v203
    %v1174 = vunpack.c.l.b16 %v204
    %v1175 = vunpack.c.h.b16 %v204
    %v1176 = vunpack.c.l.b16 %v205
    %v1177 = vunpack.c.h.b16 %v205
    %v1178 = vunpack.c.l.b16 %v206
    %v1179 = vunpack.c.h.b16 %v206
    %v1180 = vunpack.c.l.b16 %v207
    %v1181 = vunpack.c.h.b16 %v207
    %v1182 = vunpack.c.l.b16 %v208
    %v1183 = vunpack.c.h.b16 %v208
    %v1184 = vunpack.c.l.b16 %v209
    %v1185 = vunpack.c.h.b16 %v209
    %v1186 = vunpack.c.l.b16 %v210
    %v1187 = vunpack.c.h.b16 %v210
    %v1188 = vunpack.c.l.b16 %v211
    %v1189 = vunpack.c.h.b16 %v211
    %v1190 = vunpack.c.l.b16 %v212
    %v1191 = vunpack.c.h.b16 %v212
    %v1192 = vunpack.c.l.b16 %v213
    %v1193 = vunpack.c.h.b16 %v213
    %v1194 = vunpack.c.l.b16 %v214
    %v1195 = vunpack.c.h.b16 %v214
    %v1196 = vunpack.c.l.b16 %v215
    %v1197 = vunpack.c.h.b16 %v215
    %v1198 = vunpack.c.l.b16 %v216
    %v1199 = vunpack.c.h.b16 %v216
    %v1200 = vunpack.c.l.b16 %v217
    %v1201 = vunpack.c.h.b16 %v217
    %v1202 = vunpack.c.l.b16 %v218
    %v1203 = vunpack.c.h.b16 %v218
    %v1204 = vunpack.c.l.b16 %v219
    %v1205 = vunpack.c.h.b16 %v219
    %v1206 = vunpack.c.l.b16 %v220
    %v1207 = vunpack.c.h.b16 %v220
    %v1208 = vunpack.c.l.b16 %v221
    %v1209 = vunpack.c.h.b16 %v221
    %v1210 = vunpack.c.l.b16 %v222
    %v1211 = vunpack.c.h.b16 %v222
    %v1212 = vunpack.c.l.b16 %v223
    %v1213 = vunpack.c.h.b16 %v223
    %v1214 = vunpack.c.l.b16 %v224
    %v1215 = vunpack.c.h.b16 %v224
    %v1216 = vunpack.c.l.b16 %v225
    %v1217 = vunpack.c.h.b16 %v225
    %v1218 = vunpack.c.l.b16 %v226
    %v1219 = vunpack.c.h.b16 %v226
    %v1220 = vunpack.c.l.b16 %v227
    %v1221 = vunpack.c.h.b16 %v227
    %v1222 = vunpack.c.l.b16 %v228
    %v1223 = vunpack.c.h.b16 %v228
    %v1224 = vunpack.c.l.b16 %v229
    %v1225 = vunpack.c.h.b16 %v229
    %v1226 = vunpack.c.l.b16 %v230
    %v1227 = vunpack.c.h.b16 %v230
    %v1228 = vunpack.c.l.b16 %v231
    %v1229 = vunpack.c.h.b16 %v231
    %v1230 = vunpack.c.l.b16 %v232
    %v1231 = vunpack.c.h.b16 %v232
    %v1232 = vunpack.c.l.b16 %v233
    %v1233 = vunpack.c.h.b16 %v233
    %v1234 = vunpack.c.l.b16 %v234
    %v1235 = vunpack.c.h.b16 %v234
    %v1236 = vunpack.c.l.b16 %v235
    %v1237 = vunpack.c.h.b16 %v235
    %v1238 = vunpack.c.l.b16 %v236
    %v1239 = vunpack.c.h.b16 %v236
    %v1240 = vunpack.c.l.b16 %v237
    %v1241 = vunpack.c.h.b16 %v237
    %v1242 = vunpack.c.l.b16 %v238
    %v1243 = vunpack.c.h.b16 %v238
    %v1244 = vunpack.c.l.b16 %v239
    %v1245 = vunpack.c.h.b16 %v239
    %v1246 = vunpack.c.l.b16 %v240
    %v1247 = vunpack.c.h.b16 %v240
    %v1248 = vunpack.c.l.b16 %v241
    %v1249 = vunpack.c.h.b16 %v241
    %v1250 = vunpack.c.l.b16 %v242
    %v1251 = vunpack.c.h.b16 %v242
    %v1252 = vunpack.c.l.b16 %v243
    %v1253 = vunpack.c.h.b16 %v243
    %v1254 = vunpack.c.l.b16 %v244
    %v1255 = vunpack.c.h.b16 %v244
    %v1256 = vunpack.c.l.b16 %v245
    %v1257 = vunpack.c.h.b16 %v245
    %v1258 = vunpack.c.l.b16 %v246
    %v1259 = vunpack.c.h.b16 %v246
    %v1260 = vunpack.c.l.b16 %v247
    %v1261 = vunpack.c.h.b16 %v247
    %v1262 = vunpack.c.l.b16 %v248
    %v1263 = vunpack.c.h.b16 %v248
    %v1264 = vunpack.c.l.b16 %v249
    %v1265 = vunpack.c.h.b16 %v249
    %v1266 = vunpack.c.l.b16 %v250
    %v1267 = vunpack.c.h.b16 %v250
    %v1268 = vunpack.c.l.b16 %v251
    %v1269 = vunpack.c.h.b16 %v251
    %v1270 = vunpack.c.l.b16 %v252
    %v1271 = vunpack.c.h.b16 %v252
    %v1272 = vunpack.c.l.b16 %v253
    %v1273 = vunpack.c.h.b16 %v253
    %v1274 = vunpack.c.l.b16 %v254
    %v1275 = vunpack.c.h.b16 %v254
    %v1276 = vunpack.c.l.b16 %v255
    %v1277 = vunpack.c.h.b16 %v255
    %v1278 = vunpack.c.l.b16 %v256
    %v1279 = vunpack.c.h.b16 %v256
    %v1280 = vunpack.c.l.b16 %v257
    %v1281 = vunpack.c.h.b16 %v257
    %v1282 = vunpack.c.l.b16 %v258
    %v1283 = vunpack.c.h.b16 %v258
    %v1284 = vunpack.c.l.b16 %v259
    %v1285 = vunpack.c.h.b16 %v259
    %v1286 = vunpack.c.l.b16 %v260
    %v1287 = vunpack.c.h.b16 %v260
    %v1288 = vunpack.c.l.b16 %v261
    %v1289 = vunpack.c.h.b16 %v261
    %v1290 = vunpack.c.l.b16 %v262
    %v1291 = vunpack.c.h.b16 %v262
    %v1292 = vunpack.c.l.b16 %v263
    %v1293 = vunpack.c.h.b16 %v263
    %v1294 = vunpack.c.l.b16 %v264
    %v1295 = vunpack.c.h.b16 %v264
    %v1296 = vunpack.c.l.b16 %v265
    %v1297 = vunpack.c.h.b16 %v265
    %v1298 = vunpack.c.l.b16 %v266
    %v1299 = vunpack.c.h.b16 %v266
    %v1300 = vunpack.c.l.b16 %v267
    %v1301 = vunpack.c.h.b16 %v267
    %v1302 = vunpack.c.l.b16 %v268
    %v1303 = vunpack.c.h.b16 %v268
    %v1304 = vunpack.c.l.b16 %v269
    %v1305 = vunpack.c.h.b16 %v269
    %v1306 = vunpack.c.l.b16 %v270
    %v1307 = vunpack.c.h.b16 %v270
    %v1308 = vunpack.c.l.b16 %v271
    %v1309 = vunpack.c.h.b16 %v271
    %v1310 = vunpack.c.l.b16 %v272
    %v1311 = vunpack.c.h.b16 %v272
    %v1312 = vunpack.c.l.b16 %v273
    %v1313 = vunpack.c.h.b16 %v273
    %v1314 = vunpack.c.l.b16 %v274
    %v1315 = vunpack.c.h.b16 %v274
    %v1316 = vunpack.c.l.b16 %v275
    %v1317 = vunpack.c.h.b16 %v275
    %v1318 = vunpack.c.l.b16 %v276
    %v1319 = vunpack.c.h.b16 %v276
    %v1320 = vunpack.c.l.b16 %v277
    %v1321 = vunpack.c.h.b16 %v277
    %v1322 = vunpack.c.l.b16 %v278
    %v1323 = vunpack.c.h.b16 %v278
    %v1324 = vunpack.c.l.b16 %v279
    %v1325 = vunpack.c.h.b16 %v279
    %v1326 = vunpack.c.l.b16 %v280
    %v1327 = vunpack.c.h.b16 %v280
    %v1328 = vunpack.c.l.b16 %v281
    %v1329 = vunpack.c.h.b16 %v281
    %v1330 = vunpack.c.l.b16 %v282
    %v1331 = vunpack.c.h.b16 %v282
    %v1332 = vunpack.c.l.b16 %v283
    %v1333 = vunpack.c.h.b16 %v283
    %v1334 = vunpack.c.l.b16 %v284
    %v1335 = vunpack.c.h.b16 %v284
    %v1336 = vunpack.c.l.b16 %v285
    %v1337 = vunpack.c.h.b16 %v285
    %v1338 = vunpack.c.l.b16 %v286
    %v1339 = vunpack.c.h.b16 %v286
    %v1340 = vunpack.c.l.b16 %v287
    %v1341 = vunpack.c.h.b16 %v287
    %v1342 = vunpack.c.l.b16 %v288
    %v1343 = vunpack.c.h.b16 %v288
    %v1344 = vunpack.c.l.b16 %v289
    %v1345 = vunpack.c.h.b16 %v289
    %v1346 = vunpack.c.l.b16 %v290
    %v1347 = vunpack.c.h.b16 %v290
    %v1348 = vunpack.c.l.b16 %v291
    %v1349 = vunpack.c.h.b16 %v291
    %v1350 = vunpack.c.l.b16 %v292
    %v1351 = vunpack.c.h.b16 %v292
    %v1352 = vunpack.c.l.b16 %v293
    %v1353 = vunpack.c.h.b16 %v293
    %v1354 = vunpack.c.l.b16 %v294
    %v1355 = vunpack.c.h.b16 %v294
    %v1356 = vunpack.c.l.b16 %v295
    %v1357 = vunpack.c.h.b16 %v295
    %v1358 = vunpack.c.l.b16 %v296
    %v1359 = vunpack.c.h.b16 %v296
    %v1360 = vunpack.c.l.b16 %v297
    %v1361 = vunpack.c.h.b16 %v297
    %v1362 = vunpack.c.l.b16 %v298
    %v1363 = vunpack.c.h.b16 %v298
    %v1364 = vunpack.c.l.b16 %v299
    %v1365 = vunpack.c.h.b16 %v299
    %v1366 = vunpack.c.l.b16 %v300
    %v1367 = vunpack.c.h.b16 %v300
    %v1368 = vunpack.c.l.b16 %v301
    %v1369 = vunpack.c.h.b16 %v301
    %v1370 = vunpack.c.l.b16 %v302
    %v1371 = vunpack.c.h.b16 %v302
    %v1372 = vunpack.c.l.b16 %v303
    %v1373 = vunpack.c.h.b16 %v303
    %v1374 = vunpack.c.l.b16 %v304
    %v1375 = vunpack.c.h.b16 %v304
    %v1376 = vunpack.c.l.b16 %v305
    %v1377 = vunpack.c.h.b16 %v305
    %v1378 = vunpack.c.l.b16 %v306
    %v1379 = vunpack.c.h.b16 %v306
    %v1380 = vunpack.c.l.b16 %v307
    %v1381 = vunpack.c.h.b16 %v307
    %v1382 = vunpack.c.l.b16 %v308
    %v1383 = vunpack.c.h.b16 %v308
    %v1384 = vunpack.c.l.b16 %v309
    %v1385 = vunpack.c.h.b16 %v309
    %v1386 = vunpack.c.l.b16 %v310
    %v1387 = vunpack.c.h.b16 %v310
    %v1388 = vunpack.c.l.b16 %v311
    %v1389 = vunpack.c.h.b16 %v311
    %v1390 = vunpack.c.l.b16 %v312
    %v1391 = vunpack.c.h.b16 %v312
    %v1392 = vunpack.c.l.b16 %v313
    %v1393 = vunpack.c.h.b16 %v313
    %v1394 = vunpack.c.l.b16 %v314
    %v1395 = vunpack.c.h.b16 %v314
    %v1396 = vunpack.c.l.b16 %v315
    %v1397 = vunpack.c.h.b16 %v315
    %v1398 = vunpack.c.l.b16 %v316
    %v1399 = vunpack.c.h.b16 %v316
    %v1400 = vunpack.c.l.b16 %v317
    %v1401 = vunpack.c.h.b16 %v317
    %v1402 = vunpack.c.l.b16 %v318
    %v1403 = vunpack.c.h.b16 %v318
    %v1404 = vunpack.c.l.b16 %v319
    %v1405 = vunpack.c.h.b16 %v319
    %v1406 = vunpack.c.l.b16 %v320
    %v1407 = vunpack.c.h.b16 %v320
    %v1408 = vunpack.c.l.b16 %v321
    %v1409 = vunpack.c.h.b16 %v321
    %v1410 = vunpack.c.l.b16 %v322
    %v1411 = vunpack.c.h.b16 %v322
    %v1412 = vunpack.c.l.b16 %v323
    %v1413 = vunpack.c.h.b16 %v323
    %v1414 = vunpack.c.l.b16 %v324
    %v1415 = vunpack.c.h.b16 %v324
    %v1416 = vunpack.c.l.b16 %v325
    %v1417 = vunpack.c.h.b16 %v325
    %v1418 = vunpack.c.l.b16 %v326
    %v1419 = vunpack.c.h.b16 %v326
    %v1420 = vunpack.c.l.b16 %v327
    %v1421 = vunpack.c.h.b16 %v327
    %v1422 = vunpack.c.l.b16 %v328
    %v1423 = vunpack.c.h.b16 %v328
    %v1424 = vunpack.c.l.b16 %v329
    %v1425 = vunpack.c.h.b16 %v329
    %v1426 = vunpack.c.l.b16 %v330
    %v1427 = vunpack.c.h.b16 %v330
    %v1428 = vunpack.c.l.b16 %v331
    %v1429 = vunpack.c.h.b16 %v331
    %v1430 = vunpack.c.l.b16 %v332
    %v1431 = vunpack.c.h.b16 %v332
    %v1432 = vunpack.c.l.b16 %v333
    %v1433 = vunpack.c.h.b16 %v333
    %v1434 = vunpack.c.l.b16 %v334
    %v1435 = vunpack.c.h.b16 %v334
    %v1436 = vunpack.c.l.b16 %v335
    %v1437 = vunpack.c.h.b16 %v335
    %v1438 = vunpack.c.l.b16 %v336
    %v1439 = vunpack.c.h.b16 %v336
    %v1440 = vunpack.c.l.b16 %v337
    %v1441 = vunpack.c.h.b16 %v337
    %v1442 = vunpack.c.l.b16 %v338
    %v1443 = vunpack.c.h.b16 %v338
    %v1444 = vunpack.c.l.b16 %v339
    %v1445 = vunpack.c.h.b16 %v339
    %v1446 = vunpack.c.l.b16 %v340
    %v1447 = vunpack.c.h.b16 %v340
    %v1448 = vunpack.c.l.b16 %v341
    %v1449 = vunpack.c.h.b16 %v341
    %v1450 = vunpack.c.l.b16 %v342
    %v1451 = vunpack.c.h.b16 %v342
    %v1452 = vunpack.c.l.b16 %v343
    %v1453 = vunpack.c.h.b16 %v343
    %v1454 = vunpack.c.l.b16 %v344
    %v1455 = vunpack.c.h.b16 %v344
    %v1456 = vunpack.c.l.b16 %v345
    %v1457 = vunpack.c.h.b16 %v345
    %v1458 = vunpack.c.l.b16 %v346
    %v1459 = vunpack.c.h.b16 %v346
    %v1460 = vunpack.c.l.b16 %v347
    %v1461 = vunpack.c.h.b16 %v347
    %v1462 = vunpack.c.l.b16 %v348
    %v1463 = vunpack.c.h.b16 %v348
    %v1464 = vunpack.c.l.b16 %v349
    %v1465 = vunpack.c.h.b16 %v349
    %v1466 = vunpack.c.l.b16 %v350
    %v1467 = vunpack.c.h.b16 %v350
    %v1468 = vunpack.c.l.b16 %v351
    %v1469 = vunpack.c.h.b16 %v351
    %v1470 = vunpack.c.l.b16 %v352
    %v1471 = vunpack.c.h.b16 %v352
    %v1472 = vunpack.c.l.b16 %v353
    %v1473 = vunpack.c.h.b16 %v353
    %v1474 = vunpack.c.l.b16 %v354
    %v1475 = vunpack.c.h.b16 %v354
    %v1476 = vunpack.c.l.b16 %v355
    %v1477 = vunpack.c.h.b16 %v355
    %v1478 = vunpack.c.l.b16 %v356
    %v1479 = vunpack.c.h.b16 %v356
    %v1480 = vunpack.c.l.b16 %v357
    %v1481 = vunpack.c.h.b16 %v357
    %v1482 = vunpack.c.l.b16 %v358
    %v1483 = vunpack.c.h.b16 %v358
    %v1484 = vunpack.c.l.b16 %v359
    %v1485 = vunpack.c.h.b16 %v359
    %v1486 = vunpack.c.l.b16 %v360
    %v1487 = vunpack.c.h.b16 %v360
    %v1488 = vunpack.c.l.b16 %v361
    %v1489 = vunpack.c.h.b16 %v361
    %v1490 = vunpack.c.l.b16 %v362
    %v1491 = vunpack.c.h.b16 %v362
    %v1492 = vunpack.c.l.b16 %v363
    %v1493 = vunpack.c.h.b16 %v363
    %v1494 = vunpack.c.l.b16 %v364
    %v1495 = vunpack.c.h.b16 %v364
    %v1496 = vunpack.c.l.b16 %v365
    %v1497 = vunpack.c.h.b16 %v365
    %v1498 = vunpack.c.l.b16 %v366
    %v1499 = vunpack.c.h.b16 %v366
    %v1500 = vunpack.c.l.b16 %v367
    %v1501 = vunpack.c.h.b16 %v367
    %v1502 = vunpack.c.l.b16 %v368
    %v1503 = vunpack.c.h.b16 %v368
    %v1504 = vunpack.c.l.b16 %v369
    %v1505 = vunpack.c.h.b16 %v369
    %v1506 = vunpack.c.l.b16 %v370
    %v1507 = vunpack.c.h.b16 %v370
    %v1508 = vunpack.c.l.b16 %v371
    %v1509 = vunpack.c.h.b16 %v371
    %v1510 = vunpack.c.l.b16 %v372
    %v1511 = vunpack.c.h.b16 %v372
    %v1512 = vunpack.c.l.b16 %v373
    %v1513 = vunpack.c.h.b16 %v373
    %v1514 = vunpack.c.l.b16 %v374
    %v1515 = vunpack.c.h.b16 %v374
    %v1516 = vunpack.c.l.b16 %v375
    %v1517 = vunpack.c.h.b16 %v375
    %v1518 = vunpack.c.l.b16 %v376
    %v1519 = vunpack.c.h.b16 %v376
    %v1520 = vunpack.c.l.b16 %v377
    %v1521 = vunpack.c.h.b16 %v377
    %v1522 = vunpack.c.l.b16 %v378
    %v1523 = vunpack.c.h.b16 %v378
    %v1524 = vunpack.c.l.b16 %v379
    %v1525 = vunpack.c.h.b16 %v379
    %v1526 = vunpack.c.l.b16 %v380
    %v1527 = vunpack.c.h.b16 %v380
    %v1528 = vunpack.c.l.b16 %v381
    %v1529 = vunpack.c.h.b16 %v381
    %v1530 = vunpack.c.l.b16 %v382
    %v1531 = vunpack.c.h.b16 %v382
    %v1532 = vunpack.c.l.b16 %v383
    %v1533 = vunpack.c.h.b16 %v383
    %v1534 = vunpack.c.l.b16 %v384
    %v1535 = vunpack.c.h.b16 %v384
    %v1536 = vunpack.c.l.b16 %v385
    %v1537 = vunpack.c.h.b16 %v385
    %v1538 = vunpack.c.l.b16 %v386
    %v1539 = vunpack.c.h.b16 %v386
    %v1540 = vunpack.c.l.b16 %v387
    %v1541 = vunpack.c.h.b16 %v387
    %v1542 = vunpack.c.l.b16 %v388
    %v1543 = vunpack.c.h.b16 %v388
    %v1544 = vunpack.c.l.b16 %v389
    %v1545 = vunpack.c.h.b16 %v389
    %v1546 = vunpack.c.l.b16 %v390
    %v1547 = vunpack.c.h.b16 %v390
    %v1548 = vunpack.c.l.b16 %v391
    %v1549 = vunpack.c.h.b16 %v391
    %v1550 = vunpack.c.l.b16 %v392
    %v1551 = vunpack.c.h.b16 %v392
    %v1552 = vunpack.c.l.b16 %v393
    %v1553 = vunpack.c.h.b16 %v393
    %v1554 = vunpack.c.l.b16 %v394
    %v1555 = vunpack.c.h.b16 %v394
    %v1556 = vunpack.c.l.b16 %v395
    %v1557 = vunpack.c.h.b16 %v395
    %v1558 = vunpack.c.l.b16 %v396
    %v1559 = vunpack.c.h.b16 %v396
    %v1560 = vunpack.c.l.b16 %v397
    %v1561 = vunpack.c.h.b16 %v397
    %v1562 = vunpack.c.l.b16 %v398
    %v1563 = vunpack.c.h.b16 %v398
    %v1564 = vunpack.c.l.b16 %v399
    %v1565 = vunpack.c.h.b16 %v399
    %v1566 = vunpack.c.l.b16 %v400
    %v1567 = vunpack.c.h.b16 %v400
    %v1568 = vunpack.c.l.b16 %v401
    %v1569 = vunpack.c.h.b16 %v401
    %v1570 = vunpack.c.l.b16 %v402
    %v1571 = vunpack.c.h.b16 %v402
    %v1572 = vunpack.c.l.b16 %v403
    %v1573 = vunpack.c.h.b16 %v403
    %v1574 = vunpack.c.l.b16 %v404
    %v1575 = vunpack.c.h.b16 %v404
    %v1576 = vunpack.c.l.b16 %v405
    %v1577 = vunpack.c.h.b16 %v405
    %v1578 = vunpack.c.l.b16 %v406
    %v1579 = vunpack.c.h.b16 %v406
    %v1580 = vunpack.c.l.b16 %v407
    %v1581 = vunpack.c.h.b16 %v407
    %v1582 = vunpack.c.l.b16 %v408
    %v1583 = vunpack.c.h.b16 %v408
    %v1584 = vunpack.c.l.b16 %v409
    %v1585 = vunpack.c.h.b16 %v409
    %v1586 = vunpack.c.l.b16 %v410
    %v1587 = vunpack.c.h.b16 %v410
    %v1588 = vunpack.c.l.b16 %v411
    %v1589 = vunpack.c.h.b16 %v411
    %v1590 = vunpack.c.l.b16 %v412
    %v1591 = vunpack.c.h.b16 %v412
    %v1592 = vunpack.c.l.b16 %v413
    %v1593 = vunpack.c.h.b16 %v413
    %v1594 = vunpack.c.l.b16 %v414
    %v1595 = vunpack.c.h.b16 %v414
    %v1596 = vunpack.c.l.b16 %v415
    %v1597 = vunpack.c.h.b16 %v415
    %v1598 = vunpack.c.l.b16 %v416
    %v1599 = vunpack.c.h.b16 %v416
    %v1600 = vunpack.c.l.b16 %v417
    %v1601 = vunpack.c.h.b16 %v417
    %v1602 = vunpack.c.l.b16 %v418
    %v1603 = vunpack.c.h.b16 %v418
    %v1604 = vunpack.c.l.b16 %v419
    %v1605 = vunpack.c.h.b16 %v419
    %v1606 = vunpack.c.l.b16 %v420
    %v1607 = vunpack.c.h.b16 %v420
    %v1608 = vunpack.c.l.b16 %v421
    %v1609 = vunpack.c.h.b16 %v421
    %v1610 = vunpack.c.l.b16 %v422
    %v1611 = vunpack.c.h.b16 %v422
    %v1612 = vunpack.c.l.b16 %v423
    %v1613 = vunpack.c.h.b16 %v423
    %v1614 = vunpack.c.l.b16 %v424
    %v1615 = vunpack.c.h.b16 %v424
    %v1616 = vunpack.c.l.b16 %v425
    %v1617 = vunpack.c.h.b16 %v425
    %v1618 = vunpack.c.l.b16 %v426
    %v1619 = vunpack.c.h.b16 %v426
    %v1620 = vunpack.c.l.b16 %v427
    %v1621 = vunpack.c.h.b16 %v427
    %v1622 = vunpack.c.l.b16 %v428
    %v1623 = vunpack.c.h.b16 %v428
    %v1624 = vunpack.c.l.b16 %v429
    %v1625 = vunpack.c.h.b16 %v429
    %v1626 = vunpack.c.l.b16 %v430
    %v1627 = vunpack.c.h.b16 %v430
    %v1628 = vunpack.c.l.b16 %v431
    %v1629 = vunpack.c.h.b16 %v431
    %v1630 = vunpack.c.l.b16 %v432
    %v1631 = vunpack.c.h.b16 %v432
    %v1632 = vunpack.c.l.b16 %v433
    %v1633 = vunpack.c.h.b16 %v433
    %v1634 = vunpack.c.l.b16 %v434
    %v1635 = vunpack.c.h.b16 %v434
    %v1636 = vunpack.c.l.b16 %v435
    %v1637 = vunpack.c.h.b16 %v435
    %v1638 = vunpack.c.l.b16 %v436
    %v1639 = vunpack.c.h.b16 %v436
    %v1640 = vunpack.c.l.b16 %v437
    %v1641 = vunpack.c.h.b16 %v437
    %v1642 = vunpack.c.l.b16 %v438
    %v1643 = vunpack.c.h.b16 %v438
    %v1644 = vunpack.c.l.b16 %v439
    %v1645 = vunpack.c.h.b16 %v439
    %v1646 = vunpack.c.l.b16 %v440
    %v1647 = vunpack.c.h.b16 %v440
    %v1648 = vunpack.c.l.b16 %v441
    %v1649 = vunpack.c.h.b16 %v441
    %v1650 = vunpack.c.l.b16 %v442
    %v1651 = vunpack.c.h.b16 %v442
    %v1652 = vunpack.c.l.b16 %v443
    %v1653 = vunpack.c.h.b16 %v443
    %v1654 = vunpack.c.l.b16 %v444
    %v1655 = vunpack.c.h.b16 %v444
    %v1656 = vunpack.c.l.b16 %v445
    %v1657 = vunpack.c.h.b16 %v445
    %v1658 = vunpack.c.l.b16 %v446
    %v1659 = vunpack.c.h.b16 %v446
    %v1660 = vunpack.c.l.b16 %v447
    %v1661 = vunpack.c.h.b16 %v447
    %v1662 = vunpack.c.l.b16 %v448
    %v1663 = vunpack.c.h.b16 %v448
    %v1664 = vunpack.c.l.b16 %v449
    %v1665 = vunpack.c.h.b16 %v449
    %v1666 = vpack.c.b16 %v910, %v898
    %v1667 = vpack.c.b16 %v911, %v899
    %v1668 = vpack.c.b16 %v912, %v900
    %v1669 = vpack.c.b16 %v913, %v901
    %v1670 = vpack.c.b16 %v914, %v902
    %v1671 = vpack.c.b16 %v915, %v903
    %v1672 = vpack.c.b16 %v916, %v904
    %v1673 = vpack.c.b16 %v917, %v905
    %v1674 = vpack.c.b16 %v918, %v906
    %v1675 = vpack.c.b16 %v919, %v907
    %v1676 = vpack.c.b16 %v920, %v908
    %v1677 = vpack.c.b16 %v921, %v909
    %v1678 = vpack.c.b16 %v934, %v922
    %v1679 = vpack.c.b16 %v935, %v923
    %v1680 = vpack.c.b16 %v936, %v924
    %v1681 = vpack.c.b16 %v937, %v925
    %v1682 = vpack.c.b16 %v938, %v926
    %v1683 = vpack.c.b16 %v939, %v927
    %v1684 = vpack.c.b16 %v940, %v928
    %v1685 = vpack.c.b16 %v941, %v929
    %v1686 = vpack.c.b16 %v942, %v930
    %v1687 = vpack.c.b16 %v943, %v931
    %v1688 = vpack.c.b16 %v944, %v932
    %v1689 = vpack.c.b16 %v945, %v933
    %v1690 = vpack.c.b16 %v958, %v946
    %v1691 = vpack.c.b16 %v959, %v947
    %v1692 = vpack.c.b16 %v960, %v948
    %v1693 = vpack.c.b16 %v961, %v949
    %v1694 = vpack.c.b16 %v962, %v950
    %v1695 = vpack.c.b16 %v963, %v951
    %v1696 = vpack.c.b16 %v964, %v952
    %v1697 = vpack.c.b16 %v965, %v953
    %v1698 = vpack.c.b16 %v966, %v954
    %v1699 = vpack.c.b16 %v967, %v955
    %v1700 = vpack.c.b16 %v968, %v956
    %v1701 = vpack.c.b16 %v969, %v957
    %v1702 = vpack.c.b16 %v982, %v970
    %v1703 = vpack.c.b16 %v983, %v971
    %v1704 = vpack.c.b16 %v984, %v972
    %v1705 = vpack.c.b16 %v985, %v973
    %v1706 = vpack.c.b16 %v986, %v974
    %v1707 = vpack.c.b16 %v987, %v975
    %v1708 = vpack.c.b16 %v988, %v976
    %v1709 = vpack.c.b16 %v989, %v977
    %v1710 = vpack.c.b16 %v990, %v978
    %v1711 = vpack.c.b16 %v991, %v979
    %v1712 = vpack.c.b16 %v992, %v980
    %v1713 = vpack.c.b16 %v993, %v981
    %v1714 = vpack.c.b16 %v1006, %v994
    %v1715 = vpack.c.b16 %v1007, %v995
    %v1716 = vpack.c.b16 %v1008, %v996
    %v1717 = vpack.c.b16 %v1009, %v997
    %v1718 = vpack.c.b16 %v1010, %v998
    %v1719 = vpack.c.b16 %v1011, %v999
    %v1720 = vpack.c.b16 %v1012, %v1000
    %v1721 = vpack.c.b16 %v1013, %v1001
    %v1722 = vpack.c.b16 %v1014, %v1002
    %v1723 = vpack.c.b16 %v1015, %v1003
    %v1724 = vpack.c.b16 %v1016, %v1004
    %v1725 = vpack.c.b16 %v1017, %v1005
    %v1726 = vpack.c.b16 %v1030, %v1018
    %v1727 = vpack.c.b16 %v1031, %v1019
    %v1728 = vpack.c.b16 %v1032, %v1020
    %v1729 = vpack.c.b16 %v1033, %v1021
    %v1730 = vpack.c.b16 %v1034, %v1022
    %v1731 = vpack.c.b16 %v1035, %v1023
    %v1732 = vpack.c.b16 %v1036, %v1024
    %v1733 = vpack.c.b16 %v1037, %v1025
    %v1734 = vpack.c.b16 %v1038, %v1026
    %v1735 = vpack.c.b16 %v1039, %v1027
    %v1736 = vpack.c.b16 %v1040, %v1028
    %v1737 = vpack.c.b16 %v1041, %v1029
    %v1738 = vpack.c.b16 %v1054, %v1042
    %v1739 = vpack.c.b16 %v1055, %v1043
    %v1740 = vpack.c.b16 %v1056, %v1044
    %v1741 = vpack.c.b16 %v1057, %v1045
    %v1742 = vpack.c.b16 %v1058, %v1046
    %v1743 = vpack.c.b16 %v1059, %v1047
    %v1744 = vpack.c.b16 %v1060, %v1048
    %v1745 = vpack.c.b16 %v1061, %v1049
    %v1746 = vpack.c.b16 %v1062, %v1050
    %v1747 = vpack.c.b16 %v1063, %v1051
    %v1748 = vpack.c.b16 %v1064, %v1052
    %v1749 = vpack.c.b16 %v1065, %v1053
    %v1750 = vpack.c.b16 %v1078, %v1066
    %v1751 = vpack.c.b16 %v1079, %v1067
    %v1752 = vpack.c.b16 %v1080, %v1068
    %v1753 = vpack.c.b16 %v1081, %v1069
    %v1754 = vpack.c.b16 %v1082, %v1070
    %v1755 = vpack.c.b16 %v1083, %v1071
    %v1756 = vpack.c.b16 %v1084, %v1072
    %v1757 = vpack.c.b16 %v1085, %v1073
    %v1758 = vpack.c.b16 %v1086, %v1074
    %v1759 = vpack.c.b16 %v1087, %v1075
    %v1760 = vpack.c.b16 %v1088, %v1076
    %v1761 = vpack.c.b16 %v1089, %v1077
    %v1762 = vpack.c.b16 %v1102, %v1090
    %v1763 = vpack.c.b16 %v1103, %v1091
    %v1764 = vpack.c.b16 %v1104, %v1092
    %v1765 = vpack.c.b16 %v1105, %v1093
    %v1766 = vpack.c.b16 %v1106, %v1094
    %v1767 = vpack.c.b16 %v1107, %v1095
    %v1768 = vpack.c.b16 %v1108, %v1096
    %v1769 = vpack.c.b16 %v1109, %v1097
    %v1770 = vpack.c.b16 %v1110, %v1098
    %v1771 = vpack.c.b16 %v1111, %v1099
    %v1772 = vpack.c.b16 %v1112, %v1100
    %v1773 = vpack.c.b16 %v1113, %v1101
    %v1774 = vpack.c.b16 %v1126, %v1114
    %v1775 = vpack.c.b16 %v1127, %v1115
    %v1776 = vpack.c.b16 %v1128, %v1116
    %v1777 = vpack.c.b16 %v1129, %v1117
    %v1778 = vpack.c.b16 %v1130, %v1118
    %v1779 = vpack.c.b16 %v1131, %v1119
    %v1780 = vpack.c.b16 %v1132, %v1120
    %v1781 = vpack.c.b16 %v1133, %v1121
    %v1782 = vpack.c.b16 %v1134, %v1122
    %v1783 = vpack.c.b16 %v1135, %v1123
    %v1784 = vpack.c.b16 %v1136, %v1124
    %v1785 = vpack.c.b16 %v1137, %v1125
    %v1786 = vpack.c.b16 %v1150, %v1138
    %v1787 = vpack.c.b16 %v1151, %v1139
    %v1788 = vpack.c.b16 %v1152, %v1140
    %v1789 = vpack.c.b16 %v1153, %v1141
    %v1790 = vpack.c.b16 %v1154, %v1142
    %v1791 = vpack.c.b16 %v1155, %v1143
    %v1792 = vpack.c.b16 %v1156, %v1144
    %v1793 = vpack.c.b16 %v1157, %v1145
    %v1794 = vpack.c.b16 %v1158, %v1146
    %v1795 = vpack.c.b16 %v1159, %v1147
    %v1796 = vpack.c.b16 %v1160, %v1148
    %v1797 = vpack.c.b16 %v1161, %v1149
    %v1798 = vpack.c.b16 %v1174, %v1162
    %v1799 = vpack.c.b16 %v1175, %v1163
    %v1800 = vpack.c.b16 %v1176, %v1164
    %v1801 = vpack.c.b16 %v1177, %v1165
    %v1802 = vpack.c.b16 %v1178, %v1166
    %v1803 = vpack.c.b16 %v1179, %v1167
    %v1804 = vpack.c.b16 %v1180, %v1168
    %v1805 = vpack.c.b16 %v1181, %v1169
    %v1806 = vpack.c.b16 %v1182, %v1170
    %v1807 = vpack.c.b16 %v1183, %v1171
    %v1808 = vpack.c.b16 %v1184, %v1172
    %v1809 = vpack.c.b16 %v1185, %v1173
    %v1810 = vpack.c.b16 %v1198, %v1186
    %v1811 = vpack.c.b16 %v1199, %v1187
    %v1812 = vpack.c.b16 %v1200, %v1188
    %v1813 = vpack.c.b16 %v1201, %v1189
    %v1814 = vpack.c.b16 %v1202, %v1190
    %v1815 = vpack.c.b16 %v1203, %v1191
    %v1816 = vpack.c.b16 %v1204, %v1192
    %v1817 = vpack.c.b16 %v1205, %v1193
    %v1818 = vpack.c.b16 %v1206, %v1194
    %v1819 = vpack.c.b16 %v1207, %v1195
    %v1820 = vpack.c.b16 %v1208, %v1196
    %v1821 = vpack.c.b16 %v1209, %v1197
    %v1822 = vpack.c.b16 %v1222, %v1210
    %v1823 = vpack.c.b16 %v1223, %v1211
    %v1824 = vpack.c.b16 %v1224, %v1212
    %v1825 = vpack.c.b16 %v1225, %v1213
    %v1826 = vpack.c.b16 %v1226, %v1214
    %v1827 = vpack.c.b16 %v1227, %v1215
    %v1828 = vpack.c.b16 %v1228, %v1216
    %v1829 = vpack.c.b16 %v1229, %v1217
    %v1830 = vpack.c.b16 %v1230, %v1218
    %v1831 = vpack.c.b16 %v1231, %v1219
    %v1832 = vpack.c.b16 %v1232, %v1220
    %v1833 = vpack.c.b16 %v1233, %v1221
    %v1834 = vpack.c.b16 %v1246, %v1234
    %v1835 = vpack.c.b16 %v1247, %v1235
    %v1836 = vpack.c.b16 %v1248, %v1236
    %v1837 = vpack.c.b16 %v1249, %v1237
    %v1838 = vpack.c.b16 %v1250, %v1238
    %v1839 = vpack.c.b16 %v1251, %v1239
    %v1840 = vpack.c.b16 %v1252, %v1240
    %v1841 = vpack.c.b16 %v1253, %v1241
    %v1842 = vpack.c.b16 %v1254, %v1242
    %v1843 = vpack.c.b16 %v1255, %v1243
    %v1844 = vpack.c.b16 %v1256, %v1244
    %v1845 = vpack.c.b16 %v1257, %v1245
    %v1846 = vpack.c.b16 %v1270, %v1258
    %v1847 = vpack.c.b16 %v1271, %v1259
    %v1848 = vpack.c.b16 %v1272, %v1260
    %v1849 = vpack.c.b16 %v1273, %v1261
    %v1850 = vpack.c.b16 %v1274, %v1262
    %v1851 = vpack.c.b16 %v1275, %v1263
    %v1852 = vpack.c.b16 %v1276, %v1264
    %v1853 = vpack.c.b16 %v1277, %v1265
    %v1854 = vpack.c.b16 %v1278, %v1266
    %v1855 = vpack.c.b16 %v1279, %v1267
    %v1856 = vpack.c.b16 %v1280, %v1268
    %v1857 = vpack.c.b16 %v1281, %v1269
    %v1858 = vpack.c.b16 %v1294, %v1282
    %v1859 = vpack.c.b16 %v1295, %v1283
    %v1860 = vpack.c.b16 %v1296, %v1284
    %v1861 = vpack.c.b16 %v1297, %v1285
    %v1862 = vpack.c.b16 %v1298, %v1286
    %v1863 = vpack.c.b16 %v1299, %v1287
    %v1864 = vpack.c.b16 %v1300, %v1288
    %v1865 = vpack.c.b16 %v1301, %v1289
    %v1866 = vpack.c.b16 %v1302, %v1290
    %v1867 = vpack.c.b16 %v1303, %v1291
    %v1868 = vpack.c.b16 %v1304, %v1292
    %v1869 = vpack.c.b16 %v1305, %v1293
    %v1870 = vpack.c.b16 %v1318, %v1306
    %v1871 = vpack.c.b16 %v1319, %v1307
    %v1872 = vpack.c.b16 %v1320, %v1308
    %v1873 = vpack.c.b16 %v1321, %v1309
    %v1874 = vpack.c.b16 %v1322, %v1310
    %v1875 = vpack.c.b16 %v1323, %v1311
    %v1876 = vpack.c.b16 %v1324, %v1312
    %v1877 = vpack.c.b16 %v1325, %v1313
    %v1878 = vpack.c.b16 %v1326, %v1314
    %v1879 = vpack.c.b16 %v1327, %v1315
    %v1880 = vpack.c.b16 %v1328, %v1316
    %v1881 = vpack.c.b16 %v1329, %v1317
    %v1882 = vpack.c.b16 %v1342, %v1330
    %v1883 = vpack.c.b16 %v1343, %v1331
    %v1884 = vpack.c.b16 %v1344, %v1332
    %v1885 = vpack.c.b16 %v1345, %v1333
    %v1886 = vpack.c.b16 %v1346, %v1334
    %v1887 = vpack.c.b16 %v1347, %v1335
    %v1888 = vpack.c.b16 %v1348, %v1336
    %v1889 = vpack.c.b16 %v1349, %v1337
    %v1890 = vpack.c.b16 %v1350, %v1338
    %v1891 = vpack.c.b16 %v1351, %v1339
    %v1892 = vpack.c.b16 %v1352, %v1340
    %v1893 = vpack.c.b16 %v1353, %v1341
    %v1894 = vpack.c.b16 %v1366, %v1354
    %v1895 = vpack.c.b16 %v1367, %v1355
    %v1896 = vpack.c.b16 %v1368, %v1356
    %v1897 = vpack.c.b16 %v1369, %v1357
    %v1898 = vpack.c.b16 %v1370, %v1358
    %v1899 = vpack.c.b16 %v1371, %v1359
    %v1900 = vpack.c.b16 %v1372, %v1360
    %v1901 = vpack.c.b16 %v1373, %v1361
    %v1902 = vpack.c.b16 %v1374, %v1362
    %v1903 = vpack.c.b16 %v1375, %v1363
    %v1904 = vpack.c.b16 %v1376, %v1364
    %v1905 = vpack.c.b16 %v1377, %v1365
    %v1906 = vpack.c.b16 %v1390, %v1378
    %v1907 = vpack.c.b16 %v1391, %v1379
    %v1908 = vpack.c.b16 %v1392, %v1380
    %v1909 = vpack.c.b16 %v1393, %v1381
    %v1910 = vpack.c.b16 %v1394, %v1382
    %v1911 = vpack.c.b16 %v1395, %v1383
    %v1912 = vpack.c.b16 %v1396, %v1384
    %v1913 = vpack.c.b16 %v1397, %v1385
    %v1914 = vpack.c.b16 %v1398, %v1386
    %v1915 = vpack.c.b16 %v1399, %v1387
    %v1916 = vpack.c.b16 %v1400, %v1388
    %v1917 = vpack.c.b16 %v1401, %v1389
    %v1918 = vpack.c.b16 %v1414, %v1402
    %v1919 = vpack.c.b16 %v1415, %v1403
    %v1920 = vpack.c.b16 %v1416, %v1404
    %v1921 = vpack.c.b16 %v1417, %v1405
    %v1922 = vpack.c.b16 %v1418, %v1406
    %v1923 = vpack.c.b16 %v1419, %v1407
    %v1924 = vpack.c.b16 %v1420, %v1408
    %v1925 = vpack.c.b16 %v1421, %v1409
    %v1926 = vpack.c.b16 %v1422, %v1410
    %v1927 = vpack.c.b16 %v1423, %v1411
    %v1928 = vpack.c.b16 %v1424, %v1412
    %v1929 = vpack.c.b16 %v1425, %v1413
    %v1930 = vpack.c.b16 %v1438, %v1426
    %v1931 = vpack.c.b16 %v1439, %v1427
    %v1932 = vpack.c.b16 %v1440, %v1428
    %v1933 = vpack.c.b16 %v1441, %v1429
    %v1934 = vpack.c.b16 %v1442, %v1430
    %v1935 = vpack.c.b16 %v1443, %v1431
    %v1936 = vpack.c.b16 %v1444, %v1432
    %v1937 = vpack.c.b16 %v1445, %v1433
    %v1938 = vpack.c.b16 %v1446, %v1434
    %v1939 = vpack.c.b16 %v1447, %v1435
    %v1940 = vpack.c.b16 %v1448, %v1436
    %v1941 = vpack.c.b16 %v1449, %v1437
    %v1942 = vpack.c.b16 %v1462, %v1450
    %v1943 = vpack.c.b16 %v1463, %v1451
    %v1944 = vpack.c.b16 %v1464, %v1452
    %v1945 = vpack.c.b16 %v1465, %v1453
    %v1946 = vpack.c.b16 %v1466, %v1454
    %v1947 = vpack.c.b16 %v1467, %v1455
    %v1948 = vpack.c.b16 %v1468, %v1456
    %v1949 = vpack.c.b16 %v1469, %v1457
    %v1950 = vpack.c.b16 %v1470, %v1458
    %v1951 = vpack.c.b16 %v1471, %v1459
    %v1952 = vpack.c.b16 %v1472, %v1460
    %v1953 = vpack.c.b16 %v1473, %v1461
    %v1954 = vpack.c.b16 %v1486, %v1474
    %v1955 = vpack.c.b16 %v1487, %v1475
    %v1956 = vpack.c.b16 %v1488, %v1476
    %v1957 = vpack.c.b16 %v1489, %v1477
    %v1958 = vpack.c.b16 %v1490, %v1478
    %v1959 = vpack.c.b16 %v1491, %v1479
    %v1960 = vpack.c.b16 %v1492, %v1480
    %v1961 = vpack.c.b16 %v1493, %v1481
    %v1962 = vpack.c.b16 %v1494, %v1482
    %v1963 = vpack.c.b16 %v1495, %v1483
    %v1964 = vpack.c.b16 %v1496, %v1484
    %v1965 = vpack.c.b16 %v1497, %v1485
    %v1966 = vpack.c.b16 %v1510, %v1498
    %v1967 = vpack.c.b16 %v1511, %v1499
    %v1968 = vpack.c.b16 %v1512, %v1500
    %v1969 = vpack.c.b16 %v1513, %v1501
    %v1970 = vpack.c.b16 %v1514, %v1502
    %v1971 = vpack.c.b16 %v1515, %v1503
    %v1972 = vpack.c.b16 %v1516, %v1504
    %v1973 = vpack.c.b16 %v1517, %v1505
    %v1974 = vpack.c.b16 %v1518, %v1506
    %v1975 = vpack.c.b16 %v1519, %v1507
    %v1976 = vpack.c.b16 %v1520, %v1508
    %v1977 = vpack.c.b16 %v1521, %v1509
    %v1978 = vpack.c.b16 %v1534, %v1522
    %v1979 = vpack.c.b16 %v1535, %v1523
    %v1980 = vpack.c.b16 %v1536, %v1524
    %v1981 = vpack.c.b16 %v1537, %v1525
    %v1982 = vpack.c.b16 %v1538, %v1526
    %v1983 = vpack.c.b16 %v1539, %v1527
    %v1984 = vpack.c.b16 %v1540, %v1528
    %v1985 = vpack.c.b16 %v1541, %v1529
    %v1986 = vpack.c.b16 %v1542, %v1530
    %v1987 = vpack.c.b16 %v1543, %v1531
    %v1988 = vpack.c.b16 %v1544, %v1532
    %v1989 = vpack.c.b16 %v1545, %v1533
    %v1990 = vpack.c.b16 %v1558, %v1546
    %v1991 = vpack.c.b16 %v1559, %v1547
    %v1992 = vpack.c.b16 %v1560, %v1548
    %v1993 = vpack.c.b16 %v1561, %v1549
    %v1994 = vpack.c.b16 %v1562, %v1550
    %v1995 = vpack.c.b16 %v1563, %v1551
    %v1996 = vpack.c.b16 %v1564, %v1552
    %v1997 = vpack.c.b16 %v1565, %v1553
    %v1998 = vpack.c.b16 %v1566, %v1554
    %v1999 = vpack.c.b16 %v1567, %v1555
    %v2000 = vpack.c.b16 %v1568, %v1556
    %v2001 = vpack.c.b16 %v1569, %v1557
    %v2002 = vpack.c.b16 %v1582, %v1570
    %v2003 = vpack.c.b16 %v1583, %v1571
    %v2004 = vpack.c.b16 %v1584, %v1572
    %v2005 = vpack.c.b16 %v1585, %v1573
    %v2006 = vpack.c.b16 %v1586, %v1574
    %v2007 = vpack.c.b16 %v1587, %v1575
    %v2008 = vpack.c.b16 %v1588, %v1576
    %v2009 = vpack.c.b16 %v1589, %v1577
    %v2010 = vpack.c.b16 %v1590, %v1578
    %v2011 = vpack.c.b16 %v1591, %v1579
    %v2012 = vpack.c.b16 %v1592, %v1580
    %v2013 = vpack.c.b16 %v1593, %v1581
    %v2014 = vpack.c.b16 %v1606, %v1594
    %v2015 = vpack.c.b16 %v1607, %v1595
    %v2016 = vpack.c.b16 %v1608, %v1596
    %v2017 = vpack.c.b16 %v1609, %v1597
    %v2018 = vpack.c.b16 %v1610, %v1598
    %v2019 = vpack.c.b16 %v1611, %v1599
    %v2020 = vpack.c.b16 %v1612, %v1600
    %v2021 = vpack.c.b16 %v1613, %v1601
    %v2022 = vpack.c.b16 %v1614, %v1602
    %v2023 = vpack.c.b16 %v1615, %v1603
    %v2024 = vpack.c.b16 %v1616, %v1604
    %v2025 = vpack.c.b16 %v1617, %v1605
    %v2026 = vpack.c.b16 %v1630, %v1618
    %v2027 = vpack.c.b16 %v1631, %v1619
    %v2028 = vpack.c.b16 %v1632, %v1620
    %v2029 = vpack.c.b16 %v1633, %v1621
    %v2030 = vpack.c.b16 %v1634, %v1622
    %v2031 = vpack.c.b16 %v1635, %v1623
    %v2032 = vpack.c.b16 %v1636, %v1624
    %v2033 = vpack.c.b16 %v1637, %v1625
    %v2034 = vpack.c.b16 %v1638, %v1626
    %v2035 = vpack.c.b16 %v1639, %v1627
    %v2036 = vpack.c.b16 %v1640, %v1628
    %v2037 = vpack.c.b16 %v1641, %v1629
    %v2038 = vpack.c.b16 %v1654, %v1642
    %v2039 = vpack.c.b16 %v1655, %v1643
    %v2040 = vpack.c.b16 %v1656, %v1644
    %v2041 = vpack.c.b16 %v1657, %v1645
    %v2042 = vpack.c.b16 %v1658, %v1646
    %v2043 = vpack.c.b16 %v1659, %v1647
    %v2044 = vpack.c.b16 %v1660, %v1648
    %v2045 = vpack.c.b16 %v1661, %v1649
    %v2046 = vpack.c.b16 %v1662, %v1650
    %v2047 = vpack.c.b16 %v1663, %v1651
    %v2048 = vpack.c.b16 %v1664, %v1652
    %v2049 = vpack.c.b16 %v1665, %v1653
    %2434 = vmatprep.subr.bf16.mxu0 %v1667
    %2435 = vmatpush1.bf16.msra.mxu0 %v1666
    %2436 = vmatprep.subr.bf16.mxu0 %v1679
    %2437 = vmatpush1.bf16.msra.mxu0 %v1678
    %2438 = vmatprep.subr.bf16.mxu0 %v1691
    %2439 = vmatpush1.bf16.msra.mxu0 %v1690
    %2440 = vmatprep.subr.bf16.mxu0 %v1703
    %2441 = vmatpush1.bf16.msra.mxu0 %v1702
    %2442 = vmatprep.subr.bf16.mxu0 %v1715
    %2443 = vmatpush1.bf16.msra.mxu0 %v1714
    %2444 = vmatprep.subr.bf16.mxu0 %v1727
    %2445 = vmatpush1.bf16.msra.mxu0 %v1726
    %2446 = vmatprep.subr.bf16.mxu0 %v1739
    %2447 = vmatpush1.bf16.msra.mxu0 %v1738
    %2448 = vmatprep.subr.bf16.mxu0 %v1751
    %2449 = vmatpush1.bf16.msra.mxu0 %v1750
    %2450 = vmatprep.subr.bf16.mxu0 %v1763
    %2451 = vmatpush1.bf16.msra.mxu0 %v1762
    %2452 = vmatprep.subr.bf16.mxu0 %v1775
    %2453 = vmatpush1.bf16.msra.mxu0 %v1774
    %2454 = vmatprep.subr.bf16.mxu0 %v1787
    %2455 = vmatpush1.bf16.msra.mxu0 %v1786
    %2456 = vmatprep.subr.bf16.mxu0 %v1799
    %2457 = vmatpush1.bf16.msra.mxu0 %v1798
    %2458 = vmatprep.subr.bf16.mxu0 %v1811
    %2459 = vmatpush1.bf16.msra.mxu0 %v1810
    %2460 = vmatprep.subr.bf16.mxu0 %v1823
    %2461 = vmatpush1.bf16.msra.mxu0 %v1822
    %2462 = vmatprep.subr.bf16.mxu0 %v1835
    %2463 = vmatpush1.bf16.msra.mxu0 %v1834
    %2464 = vmatprep.subr.bf16.mxu0 %v1847
    %2465 = vmatpush1.bf16.msra.mxu0 %v1846
    %2466 = vmatprep.mubr.bf16.mxu0 %v63
    %2467 = vmatmul.mubr.bf16.gmra.mrb[0].mxu0 %v62
    %v2468 = vpop.f32.mrb[0].mxu0
    %v2469 = vadd.f32 %v457, %v2468
    %v2470 = vpop.f32.mrb[0].mxu0
    %v2471 = vadd.f32 %v461, %v2470
    %v2472 = vpop.f32.mrb[0].mxu0
    %v2473 = vadd.f32 %v457, %v2472
    %v2474 = vpop.f32.mrb[0].mxu0
    %v2475 = vadd.f32 %v461, %v2474
    %2476 = vdwg.mxu0
    %2477 = vmatprep.subr.bf16.mxu0 %v1859
    %2478 = vmatpush1.bf16.msra.mxu0 %v1858
    %2479 = vmatprep.subr.bf16.mxu0 %v1871
    %2480 = vmatpush1.bf16.msra.mxu0 %v1870
    %2481 = vmatprep.subr.bf16.mxu0 %v1883
    %2482 = vmatpush1.bf16.msra.mxu0 %v1882
    %2483 = vmatprep.subr.bf16.mxu0 %v1895
    %2484 = vmatpush1.bf16.msra.mxu0 %v1894
    %2485 = vmatprep.subr.bf16.mxu0 %v1907
    %2486 = vmatpush1.bf16.msra.mxu0 %v1906
    %2487 = vmatprep.subr.bf16.mxu0 %v1919
    %2488 = vmatpush1.bf16.msra.mxu0 %v1918
    %2489 = vmatprep.subr.bf16.mxu0 %v1931
    %2490 = vmatpush1.bf16.msra.mxu0 %v1930
    %2491 = vmatprep.subr.bf16.mxu0 %v1943
    %2492 = vmatpush1.bf16.msra.mxu0 %v1942
    %2493 = vmatprep.subr.bf16.mxu0 %v1955
    %2494 = vmatpush1.bf16.msra.mxu0 %v1954
    %2495 = vmatprep.subr.bf16.mxu0 %v1967
    %2496 = vmatpush1.bf16.msra.mxu0 %v1966
    %2497 = vmatprep.subr.bf16.mxu0 %v1979
    %2498 = vmatpush1.bf16.msra.mxu0 %v1978
    %2499 = vmatprep.subr.bf16.mxu0 %v1991
    %2500 = vmatpush1.bf16.msra.mxu0 %v1990
    %2501 = vmatprep.subr.bf16.mxu0 %v2003
    %2502 = vmatpush1.bf16.msra.mxu0 %v2002
    %2503 = vmatprep.subr.bf16.mxu0 %v2015
    %2504 = vmatpush1.bf16.msra.mxu0 %v2014
    %2505 = vmatprep.subr.bf16.mxu0 %v2027
    %2506 = vmatpush1.bf16.msra.mxu0 %v2026
    %2507 = vmatprep.subr.bf16.mxu0 %v2039
    %2508 = vmatpush1.bf16.msra.mxu0 %v2038
    %2509 = vmatprep.mubr.bf16.mxu0 %v65
    %2510 = vmatmul.mubr.bf16.gmra.mrb[0].mxu0 %v64
    %v2511 = vpop.f32.mrb[0].mxu0
    %v2512 = vadd.f32 %v2469, %v2511
    %v2513 = vpop.f32.mrb[0].mxu0
    %v2514 = vadd.f32 %v2471, %v2513
    %v2515 = vpop.f32.mrb[0].mxu0
    %v2516 = vadd.f32 %v2473, %v2515
    %v2517 = vpop.f32.mrb[0].mxu0
    %v2518 = vadd.f32 %v2475, %v2517
    %2519 = vdwg.mxu0
    %2520 = vmatprep.subr.bf16.mxu0 %v1669
    %2521 = vmatpush1.bf16.msra.mxu0 %v1668
    %2522 = vmatprep.subr.bf16.mxu0 %v1681
    %2523 = vmatpush1.bf16.msra.mxu0 %v1680
    %2524 = vmatprep.subr.bf16.mxu0 %v1693
    %2525 = vmatpush1.bf16.msra.mxu0 %v1692
    %2526 = vmatprep.subr.bf16.mxu0 %v1705
    %2527 = vmatpush1.bf16.msra.mxu0 %v1704
    %2528 = vmatprep.subr.bf16.mxu0 %v1717
    %2529 = vmatpush1.bf16.msra.mxu0 %v1716
    %2530 = vmatprep.subr.bf16.mxu0 %v1729
    %2531 = vmatpush1.bf16.msra.mxu0 %v1728
    %2532 = vmatprep.subr.bf16.mxu0 %v1741
    %2533 = vmatpush1.bf16.msra.mxu0 %v1740
    %2534 = vmatprep.subr.bf16.mxu0 %v1753
    %2535 = vmatpush1.bf16.msra.mxu0 %v1752
    %2536 = vmatprep.subr.bf16.mxu0 %v1765
    %2537 = vmatpush1.bf16.msra.mxu0 %v1764
    %2538 = vmatprep.subr.bf16.mxu0 %v1777
    %2539 = vmatpush1.bf16.msra.mxu0 %v1776
    %2540 = vmatprep.subr.bf16.mxu0 %v1789
    %2541 = vmatpush1.bf16.msra.mxu0 %v1788
    %2542 = vmatprep.subr.bf16.mxu0 %v1801
    %2543 = vmatpush1.bf16.msra.mxu0 %v1800
    %2544 = vmatprep.subr.bf16.mxu0 %v1813
    %2545 = vmatpush1.bf16.msra.mxu0 %v1812
    %2546 = vmatprep.subr.bf16.mxu0 %v1825
    %2547 = vmatpush1.bf16.msra.mxu0 %v1824
    %2548 = vmatprep.subr.bf16.mxu0 %v1837
    %2549 = vmatpush1.bf16.msra.mxu0 %v1836
    %2550 = vmatprep.subr.bf16.mxu0 %v1849
    %2551 = vmatpush1.bf16.msra.mxu0 %v1848
    %2552 = vmatprep.mubr.bf16.mxu0 %v63
    %2553 = vmatmul.mubr.bf16.gmra.mrb[0].mxu0 %v62
    %v2554 = vpop.f32.mrb[0].mxu0
    %v2555 = vadd.f32 %v465, %v2554
    %v2556 = vpop.f32.mrb[0].mxu0
    %v2557 = vadd.f32 %v469, %v2556
    %v2558 = vpop.f32.mrb[0].mxu0
    %v2559 = vadd.f32 %v465, %v2558
    %v2560 = vpop.f32.mrb[0].mxu0
    %v2561 = vadd.f32 %v469, %v2560
    %2562 = vdwg.mxu0
    %2563 = vmatprep.subr.bf16.mxu0 %v1861
    %2564 = vmatpush1.bf16.msra.mxu0 %v1860
    %2565 = vmatprep.subr.bf16.mxu0 %v1873
    %2566 = vmatpush1.bf16.msra.mxu0 %v1872
    %2567 = vmatprep.subr.bf16.mxu0 %v1885
    %2568 = vmatpush1.bf16.msra.mxu0 %v1884
    %2569 = vmatprep.subr.bf16.mxu0 %v1897
    %2570 = vmatpush1.bf16.msra.mxu0 %v1896
    %2571 = vmatprep.subr.bf16.mxu0 %v1909
    %2572 = vmatpush1.bf16.msra.mxu0 %v1908
    %2573 = vmatprep.subr.bf16.mxu0 %v1921
    %2574 = vmatpush1.bf16.msra.mxu0 %v1920
    %2575 = vmatprep.subr.bf16.mxu0 %v1933
    %2576 = vmatpush1.bf16.msra.mxu0 %v1932
    %2577 = vmatprep.subr.bf16.mxu0 %v1945
    %2578 = vmatpush1.bf16.msra.mxu0 %v1944
    %2579 = vmatprep.subr.bf16.mxu0 %v1957
    %2580 = vmatpush1.bf16.msra.mxu0 %v1956
    %2581 = vmatprep.subr.bf16.mxu0 %v1969
    %2582 = vmatpush1.bf16.msra.mxu0 %v1968
    %2583 = vmatprep.subr.bf16.mxu0 %v1981
    %2584 = vmatpush1.bf16.msra.mxu0 %v1980
    %2585 = vmatprep.subr.bf16.mxu0 %v1993
    %2586 = vmatpush1.bf16.msra.mxu0 %v1992
    %2587 = vmatprep.subr.bf16.mxu0 %v2005
    %2588 = vmatpush1.bf16.msra.mxu0 %v2004
    %2589 = vmatprep.subr.bf16.mxu0 %v2017
    %2590 = vmatpush1.bf16.msra.mxu0 %v2016
    %2591 = vmatprep.subr.bf16.mxu0 %v2029
    %2592 = vmatpush1.bf16.msra.mxu0 %v2028
    %2593 = vmatprep.subr.bf16.mxu0 %v2041
    %2594 = vmatpush1.bf16.msra.mxu0 %v2040
    %2595 = vmatprep.mubr.bf16.mxu0 %v65
    %2596 = vmatmul.mubr.bf16.gmra.mrb[0].mxu0 %v64
    %v2597 = vpop.f32.mrb[0].mxu0
    %v2598 = vadd.f32 %v2555, %v2597
    %v2599 = vpop.f32.mrb[0].mxu0
    %v2600 = vadd.f32 %v2557, %v2599
    %v2601 = vpop.f32.mrb[0].mxu0
    %v2602 = vadd.f32 %v2559, %v2601
    %v2603 = vpop.f32.mrb[0].mxu0
    %v2604 = vadd.f32 %v2561, %v2603
    %2605 = vdwg.mxu0
    %2606 = vmatprep.subr.bf16.mxu0 %v1671
    %2607 = vmatpush1.bf16.msra.mxu0 %v1670
    %2608 = vmatprep.subr.bf16.mxu0 %v1683
    %2609 = vmatpush1.bf16.msra.mxu0 %v1682
    %2610 = vmatprep.subr.bf16.mxu0 %v1695
    %2611 = vmatpush1.bf16.msra.mxu0 %v1694
    %2612 = vmatprep.subr.bf16.mxu0 %v1707
    %2613 = vmatpush1.bf16.msra.mxu0 %v1706
    %2614 = vmatprep.subr.bf16.mxu0 %v1719
    %2615 = vmatpush1.bf16.msra.mxu0 %v1718
    %2616 = vmatprep.subr.bf16.mxu0 %v1731
    %2617 = vmatpush1.bf16.msra.mxu0 %v1730
    %2618 = vmatprep.subr.bf16.mxu0 %v1743
    %2619 = vmatpush1.bf16.msra.mxu0 %v1742
    %2620 = vmatprep.subr.bf16.mxu0 %v1755
    %2621 = vmatpush1.bf16.msra.mxu0 %v1754
    %2622 = vmatprep.subr.bf16.mxu0 %v1767
    %2623 = vmatpush1.bf16.msra.mxu0 %v1766
    %2624 = vmatprep.subr.bf16.mxu0 %v1779
    %2625 = vmatpush1.bf16.msra.mxu0 %v1778
    %2626 = vmatprep.subr.bf16.mxu0 %v1791
    %2627 = vmatpush1.bf16.msra.mxu0 %v1790
    %2628 = vmatprep.subr.bf16.mxu0 %v1803
    %2629 = vmatpush1.bf16.msra.mxu0 %v1802
    %2630 = vmatprep.subr.bf16.mxu0 %v1815
    %2631 = vmatpush1.bf16.msra.mxu0 %v1814
    %2632 = vmatprep.subr.bf16.mxu0 %v1827
    %2633 = vmatpush1.bf16.msra.mxu0 %v1826
    %2634 = vmatprep.subr.bf16.mxu0 %v1839
    %2635 = vmatpush1.bf16.msra.mxu0 %v1838
    %2636 = vmatprep.subr.bf16.mxu0 %v1851
    %2637 = vmatpush1.bf16.msra.mxu0 %v1850
    %2638 = vmatprep.mubr.bf16.mxu0 %v63
    %2639 = vmatmul.mubr.bf16.gmra.mrb[0].mxu0 %v62
    %v2640 = vpop.f32.mrb[0].mxu0
    %v2641 = vadd.f32 %v473, %v2640
    %v2642 = vpop.f32.mrb[0].mxu0
    %v2643 = vadd.f32 %v477, %v2642
    %v2644 = vpop.f32.mrb[0].mxu0
    %v2645 = vadd.f32 %v473, %v2644
    %v2646 = vpop.f32.mrb[0].mxu0
    %v2647 = vadd.f32 %v477, %v2646
    %2648 = vdwg.mxu0
    %2649 = vmatprep.subr.bf16.mxu0 %v1863
    %2650 = vmatpush1.bf16.msra.mxu0 %v1862
    %2651 = vmatprep.subr.bf16.mxu0 %v1875
    %2652 = vmatpush1.bf16.msra.mxu0 %v1874
    %2653 = vmatprep.subr.bf16.mxu0 %v1887
    %2654 = vmatpush1.bf16.msra.mxu0 %v1886
    %2655 = vmatprep.subr.bf16.mxu0 %v1899
    %2656 = vmatpush1.bf16.msra.mxu0 %v1898
    %2657 = vmatprep.subr.bf16.mxu0 %v1911
    %2658 = vmatpush1.bf16.msra.mxu0 %v1910
    %2659 = vmatprep.subr.bf16.mxu0 %v1923
    %2660 = vmatpush1.bf16.msra.mxu0 %v1922
    %2661 = vmatprep.subr.bf16.mxu0 %v1935
    %2662 = vmatpush1.bf16.msra.mxu0 %v1934
    %2663 = vmatprep.subr.bf16.mxu0 %v1947
    %2664 = vmatpush1.bf16.msra.mxu0 %v1946
    %2665 = vmatprep.subr.bf16.mxu0 %v1959
    %2666 = vmatpush1.bf16.msra.mxu0 %v1958
    %2667 = vmatprep.subr.bf16.mxu0 %v1971
    %2668 = vmatpush1.bf16.msra.mxu0 %v1970
    %2669 = vmatprep.subr.bf16.mxu0 %v1983
    %2670 = vmatpush1.bf16.msra.mxu0 %v1982
    %2671 = vmatprep.subr.bf16.mxu0 %v1995
    %2672 = vmatpush1.bf16.msra.mxu0 %v1994
    %2673 = vmatprep.subr.bf16.mxu0 %v2007
    %2674 = vmatpush1.bf16.msra.mxu0 %v2006
    %2675 = vmatprep.subr.bf16.mxu0 %v2019
    %2676 = vmatpush1.bf16.msra.mxu0 %v2018
    %2677 = vmatprep.subr.bf16.mxu0 %v2031
    %2678 = vmatpush1.bf16.msra.mxu0 %v2030
    %2679 = vmatprep.subr.bf16.mxu0 %v2043
    %2680 = vmatpush1.bf16.msra.mxu0 %v2042
    %2681 = vmatprep.mubr.bf16.mxu0 %v65
    %2682 = vmatmul.mubr.bf16.gmra.mrb[0].mxu0 %v64
    %v2683 = vpop.f32.mrb[0].mxu0
    %v2684 = vadd.f32 %v2641, %v2683
    %v2685 = vpop.f32.mrb[0].mxu0
    %v2686 = vadd.f32 %v2643, %v2685
    %v2687 = vpop.f32.mrb[0].mxu0
    %v2688 = vadd.f32 %v2645, %v2687
    %v2689 = vpop.f32.mrb[0].mxu0
    %v2690 = vadd.f32 %v2647, %v2689
    %2691 = vdwg.mxu0
    %2692 = vmatprep.subr.bf16.mxu0 %v1673
    %2693 = vmatpush1.bf16.msra.mxu0 %v1672
    %2694 = vmatprep.subr.bf16.mxu0 %v1685
    %2695 = vmatpush1.bf16.msra.mxu0 %v1684
    %2696 = vmatprep.subr.bf16.mxu0 %v1697
    %2697 = vmatpush1.bf16.msra.mxu0 %v1696
    %2698 = vmatprep.subr.bf16.mxu0 %v1709
    %2699 = vmatpush1.bf16.msra.mxu0 %v1708
    %2700 = vmatprep.subr.bf16.mxu0 %v1721
    %2701 = vmatpush1.bf16.msra.mxu0 %v1720
    %2702 = vmatprep.subr.bf16.mxu0 %v1733
    %2703 = vmatpush1.bf16.msra.mxu0 %v1732
    %2704 = vmatprep.subr.bf16.mxu0 %v1745
    %2705 = vmatpush1.bf16.msra.mxu0 %v1744
    %2706 = vmatprep.subr.bf16.mxu0 %v1757
    %2707 = vmatpush1.bf16.msra.mxu0 %v1756
    %2708 = vmatprep.subr.bf16.mxu0 %v1769
    %2709 = vmatpush1.bf16.msra.mxu0 %v1768
    %2710 = vmatprep.subr.bf16.mxu0 %v1781
    %2711 = vmatpush1.bf16.msra.mxu0 %v1780
    %2712 = vmatprep.subr.bf16.mxu0 %v1793
    %2713 = vmatpush1.bf16.msra.mxu0 %v1792
    %2714 = vmatprep.subr.bf16.mxu0 %v1805
    %2715 = vmatpush1.bf16.msra.mxu0 %v1804
    %2716 = vmatprep.subr.bf16.mxu0 %v1817
    %2717 = vmatpush1.bf16.msra.mxu0 %v1816
    %2718 = vmatprep.subr.bf16.mxu0 %v1829
    %2719 = vmatpush1.bf16.msra.mxu0 %v1828
    %2720 = vmatprep.subr.bf16.mxu0 %v1841
    %2721 = vmatpush1.bf16.msra.mxu0 %v1840
    %2722 = vmatprep.subr.bf16.mxu0 %v1853
    %2723 = vmatpush1.bf16.msra.mxu0 %v1852
    %2724 = vmatprep.mubr.bf16.mxu0 %v63
    %2725 = vmatmul.mubr.bf16.gmra.mrb[0].mxu0 %v62
    %v2726 = vpop.f32.mrb[0].mxu0
    %v2727 = vadd.f32 %v481, %v2726
    %v2728 = vpop.f32.mrb[0].mxu0
    %v2729 = vadd.f32 %v485, %v2728
    %v2730 = vpop.f32.mrb[0].mxu0
    %v2731 = vadd.f32 %v481, %v2730
    %v2732 = vpop.f32.mrb[0].mxu0
    %v2733 = vadd.f32 %v485, %v2732
    %2734 = vdwg.mxu0
    %2735 = vmatprep.subr.bf16.mxu0 %v1865
    %2736 = vmatpush1.bf16.msra.mxu0 %v1864
    %2737 = vmatprep.subr.bf16.mxu0 %v1877
    %2738 = vmatpush1.bf16.msra.mxu0 %v1876
    %2739 = vmatprep.subr.bf16.mxu0 %v1889
    %2740 = vmatpush1.bf16.msra.mxu0 %v1888
    %2741 = vmatprep.subr.bf16.mxu0 %v1901
    %2742 = vmatpush1.bf16.msra.mxu0 %v1900
    %2743 = vmatprep.subr.bf16.mxu0 %v1913
    %2744 = vmatpush1.bf16.msra.mxu0 %v1912
    %2745 = vmatprep.subr.bf16.mxu0 %v1925
    %2746 = vmatpush1.bf16.msra.mxu0 %v1924
    %2747 = vmatprep.subr.bf16.mxu0 %v1937
    %2748 = vmatpush1.bf16.msra.mxu0 %v1936
    %2749 = vmatprep.subr.bf16.mxu0 %v1949
    %2750 = vmatpush1.bf16.msra.mxu0 %v1948
    %2751 = vmatprep.subr.bf16.mxu0 %v1961
    %2752 = vmatpush1.bf16.msra.mxu0 %v1960
    %2753 = vmatprep.subr.bf16.mxu0 %v1973
    %2754 = vmatpush1.bf16.msra.mxu0 %v1972
    %2755 = vmatprep.subr.bf16.mxu0 %v1985
    %2756 = vmatpush1.bf16.msra.mxu0 %v1984
    %2757 = vmatprep.subr.bf16.mxu0 %v1997
    %2758 = vmatpush1.bf16.msra.mxu0 %v1996
    %2759 = vmatprep.subr.bf16.mxu0 %v2009
    %2760 = vmatpush1.bf16.msra.mxu0 %v2008
    %2761 = vmatprep.subr.bf16.mxu0 %v2021
    %2762 = vmatpush1.bf16.msra.mxu0 %v2020
    %2763 = vmatprep.subr.bf16.mxu0 %v2033
    %2764 = vmatpush1.bf16.msra.mxu0 %v2032
    %2765 = vmatprep.subr.bf16.mxu0 %v2045
    %2766 = vmatpush1.bf16.msra.mxu0 %v2044
    %2767 = vmatprep.mubr.bf16.mxu0 %v65
    %2768 = vmatmul.mubr.bf16.gmra.mrb[0].mxu0 %v64
    %v2769 = vpop.f32.mrb[0].mxu0
    %v2770 = vadd.f32 %v2727, %v2769
    %v2771 = vpop.f32.mrb[0].mxu0
    %v2772 = vadd.f32 %v2729, %v2771
    %v2773 = vpop.f32.mrb[0].mxu0
    %v2774 = vadd.f32 %v2731, %v2773
    %v2775 = vpop.f32.mrb[0].mxu0
    %v2776 = vadd.f32 %v2733, %v2775
    %2777 = vdwg.mxu0
    %2778 = vmatprep.subr.bf16.mxu0 %v1675
    %2779 = vmatpush1.bf16.msra.mxu0 %v1674
    %2780 = vmatprep.subr.bf16.mxu0 %v1687
    %2781 = vmatpush1.bf16.msra.mxu0 %v1686
    %2782 = vmatprep.subr.bf16.mxu0 %v1699
    %2783 = vmatpush1.bf16.msra.mxu0 %v1698
    %2784 = vmatprep.subr.bf16.mxu0 %v1711
    %2785 = vmatpush1.bf16.msra.mxu0 %v1710
    %2786 = vmatprep.subr.bf16.mxu0 %v1723
    %2787 = vmatpush1.bf16.msra.mxu0 %v1722
    %2788 = vmatprep.subr.bf16.mxu0 %v1735
    %2789 = vmatpush1.bf16.msra.mxu0 %v1734
    %2790 = vmatprep.subr.bf16.mxu0 %v1747
    %2791 = vmatpush1.bf16.msra.mxu0 %v1746
    %2792 = vmatprep.subr.bf16.mxu0 %v1759
    %2793 = vmatpush1.bf16.msra.mxu0 %v1758
    %2794 = vmatprep.subr.bf16.mxu0 %v1771
    %2795 = vmatpush1.bf16.msra.mxu0 %v1770
    %2796 = vmatprep.subr.bf16.mxu0 %v1783
    %2797 = vmatpush1.bf16.msra.mxu0 %v1782
    %2798 = vmatprep.subr.bf16.mxu0 %v1795
    %2799 = vmatpush1.bf16.msra.mxu0 %v1794
    %2800 = vmatprep.subr.bf16.mxu0 %v1807
    %2801 = vmatpush1.bf16.msra.mxu0 %v1806
    %2802 = vmatprep.subr.bf16.mxu0 %v1819
    %2803 = vmatpush1.bf16.msra.mxu0 %v1818
    %2804 = vmatprep.subr.bf16.mxu0 %v1831
    %2805 = vmatpush1.bf16.msra.mxu0 %v1830
    %2806 = vmatprep.subr.bf16.mxu0 %v1843
    %2807 = vmatpush1.bf16.msra.mxu0 %v1842
    %2808 = vmatprep.subr.bf16.mxu0 %v1855
    %2809 = vmatpush1.bf16.msra.mxu0 %v1854
    %2810 = vmatprep.mubr.bf16.mxu0 %v63
    %2811 = vmatmul.mubr.bf16.gmra.mrb[0].mxu0 %v62
    %v2812 = vpop.f32.mrb[0].mxu0
    %v2813 = vadd.f32 %v489, %v2812
    %v2814 = vpop.f32.mrb[0].mxu0
    %v2815 = vadd.f32 %v493, %v2814
    %v2816 = vpop.f32.mrb[0].mxu0
    %v2817 = vadd.f32 %v489, %v2816
    %v2818 = vpop.f32.mrb[0].mxu0
    %v2819 = vadd.f32 %v493, %v2818
    %2820 = vdwg.mxu0
    %2821 = vmatprep.subr.bf16.mxu0 %v1867
    %2822 = vmatpush1.bf16.msra.mxu0 %v1866
    %2823 = vmatprep.subr.bf16.mxu0 %v1879
    %2824 = vmatpush1.bf16.msra.mxu0 %v1878
    %2825 = vmatprep.subr.bf16.mxu0 %v1891
    %2826 = vmatpush1.bf16.msra.mxu0 %v1890
    %2827 = vmatprep.subr.bf16.mxu0 %v1903
    %2828 = vmatpush1.bf16.msra.mxu0 %v1902
    %2829 = vmatprep.subr.bf16.mxu0 %v1915
    %2830 = vmatpush1.bf16.msra.mxu0 %v1914
    %2831 = vmatprep.subr.bf16.mxu0 %v1927
    %2832 = vmatpush1.bf16.msra.mxu0 %v1926
    %2833 = vmatprep.subr.bf16.mxu0 %v1939
    %2834 = vmatpush1.bf16.msra.mxu0 %v1938
    %2835 = vmatprep.subr.bf16.mxu0 %v1951
    %2836 = vmatpush1.bf16.msra.mxu0 %v1950
    %2837 = vmatprep.subr.bf16.mxu0 %v1963
    %2838 = vmatpush1.bf16.msra.mxu0 %v1962
    %2839 = vmatprep.subr.bf16.mxu0 %v1975
    %2840 = vmatpush1.bf16.msra.mxu0 %v1974
    %2841 = vmatprep.subr.bf16.mxu0 %v1987
    %2842 = vmatpush1.bf16.msra.mxu0 %v1986
    %2843 = vmatprep.subr.bf16.mxu0 %v1999
    %2844 = vmatpush1.bf16.msra.mxu0 %v1998
    %2845 = vmatprep.subr.bf16.mxu0 %v2011
    %2846 = vmatpush1.bf16.msra.mxu0 %v2010
    %2847 = vmatprep.subr.bf16.mxu0 %v2023
    %2848 = vmatpush1.bf16.msra.mxu0 %v2022
    %2849 = vmatprep.subr.bf16.mxu0 %v2035
    %2850 = vmatpush1.bf16.msra.mxu0 %v2034
    %2851 = vmatprep.subr.bf16.mxu0 %v2047
    %2852 = vmatpush1.bf16.msra.mxu0 %v2046
    %2853 = vmatprep.mubr.bf16.mxu0 %v65
    %2854 = vmatmul.mubr.bf16.gmra.mrb[0].mxu0 %v64
    %v2855 = vpop.f32.mrb[0].mxu0
    %v2856 = vadd.f32 %v2813, %v2855
    %v2857 = vpop.f32.mrb[0].mxu0
    %v2858 = vadd.f32 %v2815, %v2857
    %v2859 = vpop.f32.mrb[0].mxu0
    %v2860 = vadd.f32 %v2817, %v2859
    %v2861 = vpop.f32.mrb[0].mxu0
    %v2862 = vadd.f32 %v2819, %v2861
    %2863 = vdwg.mxu0
    %2864 = vmatprep.subr.bf16.mxu0 %v1677
    %2865 = vmatpush1.bf16.msra.mxu0 %v1676
    %2866 = vmatprep.subr.bf16.mxu0 %v1689
    %2867 = vmatpush1.bf16.msra.mxu0 %v1688
    %2868 = vmatprep.subr.bf16.mxu0 %v1701
    %2869 = vmatpush1.bf16.msra.mxu0 %v1700
    %2870 = vmatprep.subr.bf16.mxu0 %v1713
    %2871 = vmatpush1.bf16.msra.mxu0 %v1712
    %2872 = vmatprep.subr.bf16.mxu0 %v1725
    %2873 = vmatpush1.bf16.msra.mxu0 %v1724
    %2874 = vmatprep.subr.bf16.mxu0 %v1737
    %2875 = vmatpush1.bf16.msra.mxu0 %v1736
    %2876 = vmatprep.subr.bf16.mxu0 %v1749
    %2877 = vmatpush1.bf16.msra.mxu0 %v1748
    %2878 = vmatprep.subr.bf16.mxu0 %v1761
    %2879 = vmatpush1.bf16.msra.mxu0 %v1760
    %2880 = vmatprep.subr.bf16.mxu0 %v1773
    %2881 = vmatpush1.bf16.msra.mxu0 %v1772
    %2882 = vmatprep.subr.bf16.mxu0 %v1785
    %2883 = vmatpush1.bf16.msra.mxu0 %v1784
    %2884 = vmatprep.subr.bf16.mxu0 %v1797
    %2885 = vmatpush1.bf16.msra.mxu0 %v1796
    %2886 = vmatprep.subr.bf16.mxu0 %v1809
    %2887 = vmatpush1.bf16.msra.mxu0 %v1808
    %2888 = vmatprep.subr.bf16.mxu0 %v1821
    %2889 = vmatpush1.bf16.msra.mxu0 %v1820
    %2890 = vmatprep.subr.bf16.mxu0 %v1833
    %2891 = vmatpush1.bf16.msra.mxu0 %v1832
    %2892 = vmatprep.subr.bf16.mxu0 %v1845
    %2893 = vmatpush1.bf16.msra.mxu0 %v1844
    %2894 = vmatprep.subr.bf16.mxu0 %v1857
    %2895 = vmatpush1.bf16.msra.mxu0 %v1856
    %2896 = vmatprep.mubr.bf16.mxu0 %v63
    %2897 = vmatmul.mubr.bf16.gmra.mrb[0].mxu0 %v62
    %v2898 = vpop.f32.mrb[0].mxu0
    %v2899 = vadd.f32 %v497, %v2898
    %v2900 = vpop.f32.mrb[0].mxu0
    %v2901 = vadd.f32 %v501, %v2900
    %v2902 = vpop.f32.mrb[0].mxu0
    %v2903 = vadd.f32 %v497, %v2902
    %v2904 = vpop.f32.mrb[0].mxu0
    %v2905 = vadd.f32 %v501, %v2904
    %2906 = vdwg.mxu0
    %2907 = vmatprep.subr.bf16.mxu0 %v1869
    %2908 = vmatpush1.bf16.msra.mxu0 %v1868
    %2909 = vmatprep.subr.bf16.mxu0 %v1881
    %2910 = vmatpush1.bf16.msra.mxu0 %v1880
    %2911 = vmatprep.subr.bf16.mxu0 %v1893
    %2912 = vmatpush1.bf16.msra.mxu0 %v1892
    %2913 = vmatprep.subr.bf16.mxu0 %v1905
    %2914 = vmatpush1.bf16.msra.mxu0 %v1904
    %2915 = vmatprep.subr.bf16.mxu0 %v1917
    %2916 = vmatpush1.bf16.msra.mxu0 %v1916
    %2917 = vmatprep.subr.bf16.mxu0 %v1929
    %2918 = vmatpush1.bf16.msra.mxu0 %v1928
    %2919 = vmatprep.subr.bf16.mxu0 %v1941
    %2920 = vmatpush1.bf16.msra.mxu0 %v1940
    %2921 = vmatprep.subr.bf16.mxu0 %v1953
    %2922 = vmatpush1.bf16.msra.mxu0 %v1952
    %2923 = vmatprep.subr.bf16.mxu0 %v1965
    %2924 = vmatpush1.bf16.msra.mxu0 %v1964
    %2925 = vmatprep.subr.bf16.mxu0 %v1977
    %2926 = vmatpush1.bf16.msra.mxu0 %v1976
    %2927 = vmatprep.subr.bf16.mxu0 %v1989
    %2928 = vmatpush1.bf16.msra.mxu0 %v1988
    %2929 = vmatprep.subr.bf16.mxu0 %v2001
    %2930 = vmatpush1.bf16.msra.mxu0 %v2000
    %2931 = vmatprep.subr.bf16.mxu0 %v2013
    %2932 = vmatpush1.bf16.msra.mxu0 %v2012
    %2933 = vmatprep.subr.bf16.mxu0 %v2025
    %2934 = vmatpush1.bf16.msra.mxu0 %v2024
    %2935 = vmatprep.subr.bf16.mxu0 %v2037
    %2936 = vmatpush1.bf16.msra.mxu0 %v2036
    %2937 = vmatprep.subr.bf16.mxu0 %v2049
    %2938 = vmatpush1.bf16.msra.mxu0 %v2048
    %2939 = vmatprep.mubr.bf16.mxu0 %v65
    %2940 = vmatmul.mubr.bf16.gmra.mrb[0].mxu0 %v64
    %v2941 = vpop.f32.mrb[0].mxu0
    %v2942 = vadd.f32 %v2899, %v2941
    %v2943 = vpop.f32.mrb[0].mxu0
    %v2944 = vadd.f32 %v2901, %v2943
    %v2945 = vpop.f32.mrb[0].mxu0
    %v2946 = vadd.f32 %v2903, %v2945
    %v2947 = vpop.f32.mrb[0].mxu0
    %v2948 = vadd.f32 %v2905, %v2947
    %2949 = vdwg.mxu0
    %2950 = vst [vmem:[#allocation8] sm:$0xff] %v2512
    %2951 = vst [vmem:[#allocation8 + $0x8] sm:$0xff] %v2514
    %2952 = vst [vmem:[#allocation8 + $0x10] sm:$0xff] %v2598
    %2953 = vst [vmem:[#allocation8 + $0x18] sm:$0xff] %v2600
    %2954 = vst [vmem:[#allocation8 + $0x20] sm:$0xff] %v2684
    %2955 = vst [vmem:[#allocation8 + $0x28] sm:$0xff] %v2686
    %2956 = vst [vmem:[#allocation8 + $0x30] sm:$0xff] %v2770
    %2957 = vst [vmem:[#allocation8 + $0x38] sm:$0xff] %v2772
    %2958 = vst [vmem:[#allocation8 + $0x40] sm:$0xff] %v2856
    %2959 = vst [vmem:[#allocation8 + $0x48] sm:$0xff] %v2858
    %2960 = vst [vmem:[#allocation8 + $0x50] sm:$0xff] %v2942
    %2961 = vst [vmem:[#allocation8 + $0x58] sm:$0xff] %v2944
    %2962 = vst [vmem:[#allocation8 + $0x60] sm:$0xff] %v2516
    %2963 = vst [vmem:[#allocation8 + $0x68] sm:$0xff] %v2518
    %2964 = vst [vmem:[#allocation8 + $0x70] sm:$0xff] %v2602
    %2965 = vst [vmem:[#allocation8 + $0x78] sm:$0xff] %v2604
    %2966 = vst [vmem:[#allocation8 + $0x80] sm:$0xff] %v2688
    %2967 = vst [vmem:[#allocation8 + $0x88] sm:$0xff] %v2690
    %2968 = vst [vmem:[#allocation8 + $0x90] sm:$0xff] %v2774
    %2969 = vst [vmem:[#allocation8 + $0x98] sm:$0xff] %v2776
    %2970 = vst [vmem:[#allocation8 + $0xa0] sm:$0xff] %v2860
    %2971 = vst [vmem:[#allocation8 + $0xa8] sm:$0xff] %v2862
    %2972 = vst [vmem:[#allocation8 + $0xb0] sm:$0xff] %v2946
    %2973 = vst [vmem:[#allocation8 + $0xb8] sm:$0xff] %v2948
    // Predicated region
    $region26: #{tpu_custom_call.1} parent=1 // pred_check
      _
    $region27: #{tpu_custom_call.1} parent=1 // pred_check_branch
      %2975 = sbr.rel (0) target = $region29
    $region28: #{tpu_custom_call.1} parent=1 // pred_region
      %s2977 = ssub.s32 3072, 3072
      %2978 = vsyncadd [#allocation4], %s2977
      %s2979 = sshll.u32 [#allocation8], 4
      %s2980 = int_to_ptr.vmem [resolvable:$true] %s2979
      %2985 = dma.vmem_to_hbm [thread:$0]  %s2980, 3072, %s3, [#allocation4], 1536, 1536, 96
    $region29: #{tpu_custom_call.1} parent=1 // pred_fallthru
      _
    // Predicated region
    $region30: #{tpu_custom_call.1} parent=1 // pred_check
      _
    $region31: #{tpu_custom_call.1} parent=1 // pred_check_branch
      %2987 = sbr.rel (0) target = $region33
    $region32: #{tpu_custom_call.1} parent=1 // pred_region
      %2988 = dma.done [#allocation4], 3072
    $region33: #{tpu_custom_call.1} parent=1 // pred_fallthru
      _
    %2989 = vsyncpa [#allocation3], 1
    %2990 = vsyncpa [#allocation6], 1
    %2991 = vsyncpa [#allocation4], 1

</llo_original>
